<compile_context>
chip_gen: v6e
topology: v6e:2x2x1
jax: 0.10.0
libtpu: 0.0.40
codegen_flags: <defaults>
</compile_context>

<pallas_src>
import functools
import math

import jax
import jax.numpy as jnp
from jax.experimental import pallas as pl
from jax.experimental.pallas import tpu as pltpu


def _layer_norm(v, g, b, eps=1e-12):
    mu = jnp.mean(v, axis=-1, keepdims=True)
    var = jnp.mean((v - mu) ** 2, axis=-1, keepdims=True)
    return (v - mu) * jax.lax.rsqrt(var + eps) * g + b


def _encoder_stack_kernel(x_ref, mask_ref,
                          ln1g_ref, ln1b_ref,
                          wq_ref, bq_ref, wk_ref, bk_ref, wv_ref, bv_ref,
                          wo_ref, bo_ref,
                          ln2g_ref, ln2b_ref,
                          w1_ref, b1_ref, w2_ref, b2_ref,
                          o_ref,
                          h_ref,
                          *, num_heads):
    """One (batch, layer) grid step of the fused encoder stack.

    x_ref   : (1, T, D)   input block for this batch element
    mask_ref: (1, 1, T, T) attention mask (0 => masked)
    *_ref   : per-layer weight / bias / LN blocks for layer pl.program_id(1)
    o_ref   : (1, T, D)   output block for this batch element
    h_ref   : (T, D) f32  VMEM scratch; activations resident across the layer axis
    """
    layer = pl.program_id(1)

    @pl.when(layer == 0)
    def _():
        h_ref[...] = x_ref[0].astype(jnp.float32)

    x = h_ref[...]                                  # (T, D) f32 carry
    T, D = x.shape
    d_k = D // num_heads
    scale = 1.0 / math.sqrt(d_k)

    mask = mask_ref[0, 0]                           # (T, T)

    # ---- sublayer 1: ln1 -> multi-head self-attention -> residual ----------
    xn = _layer_norm(x, ln1g_ref[0], ln1b_ref[0])

    q = jnp.dot(xn, wq_ref[0], preferred_element_type=jnp.float32) + bq_ref[0]
    k = jnp.dot(xn, wk_ref[0], preferred_element_type=jnp.float32) + bk_ref[0]
    v = jnp.dot(xn, wv_ref[0], preferred_element_type=jnp.float32) + bv_ref[0]

    ctx_parts = []
    for hh in range(num_heads):                     # num_heads is small & static: unrolled
        sl = slice(hh * d_k, (hh + 1) * d_k)
        q_h = q[:, sl]                              # (T, d_k)
        k_h = k[:, sl]
        v_h = v[:, sl]
        # q_h @ k_h^T without materializing the transpose.
        s = jax.lax.dot_general(q_h, k_h, (((1,), (1,)), ((), ())),
                                preferred_element_type=jnp.float32) * scale   # (T, T)
        s = jnp.where(mask == 0, -1e9, s)
        s = s - jnp.max(s, axis=-1, keepdims=True)
        p = jnp.exp(s)
        p = p / jnp.sum(p, axis=-1, keepdims=True)
        ctx_parts.append(jnp.dot(p, v_h, preferred_element_type=jnp.float32))  # (T, d_k)
    ctx = jnp.concatenate(ctx_parts, axis=-1)                                   # (T, D)

    attn_out = jnp.dot(ctx, wo_ref[0], preferred_element_type=jnp.float32) + bo_ref[0]
    x1 = xn + attn_out                              # dropout is identity in eval mode

    # ---- sublayer 2: ln2 -> FFN -> residual ---------------------------------
    xn2 = _layer_norm(x1, ln2g_ref[0], ln2b_ref[0])
    hid = jnp.maximum(
        jnp.dot(xn2, w1_ref[0], preferred_element_type=jnp.float32) + b1_ref[0], 0.0)
    ff = jnp.dot(hid, w2_ref[0], preferred_element_type=jnp.float32) + b2_ref[0]
    out = xn2 + ff

    h_ref[...] = out

    @pl.when(layer == pl.num_programs(1) - 1)
    def _():
        o_ref[0] = out.astype(o_ref.dtype)


def transformer_encoder_stack_forward(x, mask, params, *, num_heads):
    """x: (B, T, D) f32; mask: (B, 1, T, T); params: dict of layer-stacked arrays."""
    B, T, D = x.shape
    L = params["wq"].shape[0]
    d_ff = params["w1"].shape[-1]

    x_spec = pl.BlockSpec((1, T, D), lambda b, l: (b, 0, 0))
    mask_spec = pl.BlockSpec((1, 1, T, T), lambda b, l: (b, 0, 0, 0))
    w_dd_spec = pl.BlockSpec((1, D, D), lambda b, l: (l, 0, 0))
    vec_d_spec = pl.BlockSpec((1, 1, D), lambda b, l: (l, 0, 0))
    w1_spec = pl.BlockSpec((1, D, d_ff), lambda b, l: (l, 0, 0))
    b1_spec = pl.BlockSpec((1, 1, d_ff), lambda b, l: (l, 0, 0))
    w2_spec = pl.BlockSpec((1, d_ff, D), lambda b, l: (l, 0, 0))
    out_spec = pl.BlockSpec((1, T, D), lambda b, l: (b, 0, 0))

    kernel = functools.partial(_encoder_stack_kernel, num_heads=num_heads)
    return pl.pallas_call(
        kernel,
        out_shape=jax.ShapeDtypeStruct((B, T, D), x.dtype),
        grid_spec=pltpu.PrefetchScalarGridSpec(
            num_scalar_prefetch=0,
            grid=(B, L),
            in_specs=[
                x_spec, mask_spec,
                vec_d_spec, vec_d_spec,            # ln1 gamma, beta
                w_dd_spec, vec_d_spec,             # Wq, bq
                w_dd_spec, vec_d_spec,             # Wk, bk
                w_dd_spec, vec_d_spec,             # Wv, bv
                w_dd_spec, vec_d_spec,             # Wo, bo
                vec_d_spec, vec_d_spec,            # ln2 gamma, beta
                w1_spec, b1_spec,                  # FFN W1, b1
                w2_spec, vec_d_spec,               # FFN W2, b2
            ],
            out_specs=out_spec,
            scratch_shapes=[pltpu.VMEM((T, D), jnp.float32)],
        ),
        compiler_params=pltpu.CompilerParams(
            dimension_semantics=("parallel", "arbitrary")),
    )(x, mask,
      params["ln1_g"], params["ln1_b"],
      params["wq"], params["bq"], params["wk"], params["bk"],
      params["wv"], params["bv"], params["wo"], params["bo"],
      params["ln2_g"], params["ln2_b"],
      params["w1"], params["b1"], params["w2"], params["b2"])


def _reference_forward(x, mask, params, *, num_heads):
    """Pure-JAX reference matching the PyTorch module math."""
    B, T, D = x.shape
    L = params["wq"].shape[0]
    d_k = D // num_heads

    def layer_norm(v, g, b, eps=1e-12):
        mu = jnp.mean(v, axis=-1, keepdims=True)
        var = jnp.mean((v - mu) ** 2, axis=-1, keepdims=True)
        return (v - mu) / jnp.sqrt(var + eps) * g + b

    for l in range(L):
        xn = layer_norm(x, params["ln1_g"][l, 0], params["ln1_b"][l, 0])
        q = xn @ params["wq"][l] + params["bq"][l, 0]
        k = xn @ params["wk"][l] + params["bk"][l, 0]
        v = xn @ params["wv"][l] + params["bv"][l, 0]
        qh = q.reshape(B, T, num_heads, d_k).transpose(0, 2, 1, 3)
        kh = k.reshape(B, T, num_heads, d_k).transpose(0, 2, 1, 3)
        vh = v.reshape(B, T, num_heads, d_k).transpose(0, 2, 1, 3)
        scores = jnp.einsum("bhqd,bhkd->bhqk", qh, kh) / math.sqrt(d_k)
        scores = jnp.where(mask == 0, -1e9, scores)
        w = jax.nn.softmax(scores, axis=-1)
        ctx = jnp.einsum("bhqk,bhkd->bhqd", w, vh).transpose(0, 2, 1, 3).reshape(B, T, D)
        attn = ctx @ params["wo"][l] + params["bo"][l, 0]
        x = xn + attn
        xn2 = layer_norm(x, params["ln2_g"][l, 0], params["ln2_b"][l, 0])
        ff = jnp.maximum(xn2 @ params["w1"][l] + params["b1"][l, 0], 0.0)
        ff = ff @ params["w2"][l] + params["b2"][l, 0]
        x = xn2 + ff
    return x


if __name__ == "__main__":
    key = jax.random.PRNGKey(0)

    B, T, D = 2, 16, 32          # batch, seq length, d_model
    num_heads = 4                # d_k = 8
    d_ff = 4 * D                 # 128 (PyTorch default d_ff = 4*d_model), lane-dense
    L = 2                        # layers in the stack

    def init_linear(k, fan_in, fan_out):
        bound = 1.0 / math.sqrt(fan_in)
        kw, kb = jax.random.split(k)
        w = jax.random.uniform(kw, (L, fan_in, fan_out), jnp.float32, -bound, bound)
        b = jax.random.uniform(kb, (L, 1, fan_out), jnp.float32, -bound, bound)
        return w, b

    k_x, k_q, k_k, k_v, k_o, k_1, k_2, k_g1, k_b1, k_g2, k_b2 = jax.random.split(key, 11)

    x = jax.random.normal(k_x, (B, T, D), dtype=jnp.float32)

    wq, bq = init_linear(k_q, D, D)
    wk, bk = init_linear(k_k, D, D)
    wv, bv = init_linear(k_v, D, D)
    wo, bo = init_linear(k_o, D, D)
    w1, b1 = init_linear(k_1, D, d_ff)
    w2, b2 = init_linear(k_2, d_ff, D)

    params = {
        "ln1_g": 1.0 + 0.1 * jax.random.normal(k_g1, (L, 1, D), jnp.float32),
        "ln1_b": 0.1 * jax.random.normal(k_b1, (L, 1, D), jnp.float32),
        "ln2_g": 1.0 + 0.1 * jax.random.normal(k_g2, (L, 1, D), jnp.float32),
        "ln2_b": 0.1 * jax.random.normal(k_b2, (L, 1, D), jnp.float32),
        "wq": wq, "bq": bq, "wk": wk, "bk": bk, "wv": wv, "bv": bv, "wo": wo, "bo": bo,
        "w1": w1, "b1": b1, "w2": w2, "b2": b2,
    }

    # Padding-style mask: batch 0 attends to all T keys, batch 1 only to the first T-5.
    lengths = jnp.array([T, T - 5], dtype=jnp.int32)
    valid = (jnp.arange(T)[None, :] < lengths[:, None]).astype(jnp.float32)     # (B, T)
    mask = valid[:, None, None, :] * jnp.ones((B, 1, T, T), jnp.float32)        # (B, 1, T, T)

    out = transformer_encoder_stack_forward(x, mask, params, num_heads=num_heads)
    out = jax.block_until_ready(out)

    ref = jax.block_until_ready(_reference_forward(x, mask, params, num_heads=num_heads))

    assert out.shape == (B, T, D), out.shape
    max_err = float(jnp.max(jnp.abs(out - ref)))
    assert jnp.allclose(out, ref, atol=1e-4, rtol=1e-4), max_err

    print("KERNEL_OK")
</pallas_src>

<mosaic_0001>
module attributes {stable_mosaic.version = 11 : i64} {
  func.func @_encoder_stack_kernel(%arg0: i32, %arg1: i32, %arg2: memref<1x16x32xf32, #tpu.memory_space<vmem>>, %arg3: memref<1x1x16x16xf32, #tpu.memory_space<vmem>>, %arg4: memref<1x1x32xf32, #tpu.memory_space<vmem>>, %arg5: memref<1x1x32xf32, #tpu.memory_space<vmem>>, %arg6: memref<1x32x32xf32, #tpu.memory_space<vmem>>, %arg7: memref<1x1x32xf32, #tpu.memory_space<vmem>>, %arg8: memref<1x32x32xf32, #tpu.memory_space<vmem>>, %arg9: memref<1x1x32xf32, #tpu.memory_space<vmem>>, %arg10: memref<1x32x32xf32, #tpu.memory_space<vmem>>, %arg11: memref<1x1x32xf32, #tpu.memory_space<vmem>>, %arg12: memref<1x32x32xf32, #tpu.memory_space<vmem>>, %arg13: memref<1x1x32xf32, #tpu.memory_space<vmem>>, %arg14: memref<1x1x32xf32, #tpu.memory_space<vmem>>, %arg15: memref<1x1x32xf32, #tpu.memory_space<vmem>>, %arg16: memref<1x32x128xf32, #tpu.memory_space<vmem>>, %arg17: memref<1x1x128xf32, #tpu.memory_space<vmem>>, %arg18: memref<1x128x32xf32, #tpu.memory_space<vmem>>, %arg19: memref<1x1x32xf32, #tpu.memory_space<vmem>>, %arg20: memref<1x16x32xf32, #tpu.memory_space<vmem>>, %arg21: memref<16x32xf32, #tpu.memory_space<vmem>>) attributes {dimension_semantics = [#tpu.dimension_semantics<parallel>, #tpu.dimension_semantics<arbitrary>], iteration_bounds = array<i64: 2, 2>, scalar_prefetch = 0 : i64, scratch_operands = 1 : i64, tpu.core_type = #tpu.core_type<tc>, window_params = [{transform_indices = @transform_0, window_bounds = array<i64: 1, 16, 32>}, {transform_indices = @transform_1, window_bounds = array<i64: 1, 1, 16, 16>}, {transform_indices = @transform_2, window_bounds = array<i64: 1, 1, 32>}, {transform_indices = @transform_3, window_bounds = array<i64: 1, 1, 32>}, {transform_indices = @transform_4, window_bounds = array<i64: 1, 32, 32>}, {transform_indices = @transform_5, window_bounds = array<i64: 1, 1, 32>}, {transform_indices = @transform_6, window_bounds = array<i64: 1, 32, 32>}, {transform_indices = @transform_7, window_bounds = array<i64: 1, 1, 32>}, {transform_indices = @transform_8, window_bounds = array<i64: 1, 32, 32>}, {transform_indices = @transform_9, window_bounds = array<i64: 1, 1, 32>}, {transform_indices = @transform_10, window_bounds = array<i64: 1, 32, 32>}, {transform_indices = @transform_11, window_bounds = array<i64: 1, 1, 32>}, {transform_indices = @transform_12, window_bounds = array<i64: 1, 1, 32>}, {transform_indices = @transform_13, window_bounds = array<i64: 1, 1, 32>}, {transform_indices = @transform_14, window_bounds = array<i64: 1, 32, 128>}, {transform_indices = @transform_15, window_bounds = array<i64: 1, 1, 128>}, {transform_indices = @transform_16, window_bounds = array<i64: 1, 128, 32>}, {transform_indices = @transform_17, window_bounds = array<i64: 1, 1, 32>}, {transform_indices = @transform_18, window_bounds = array<i64: 1, 16, 32>}]} {
    %c0_i32 = arith.constant 0 : i32
    %0 = arith.cmpi eq, %arg1, %c0_i32 : i32
    %1 = arith.extui %0 : i1 to i32
    %c0_i32_0 = arith.constant 0 : i32
    %2 = arith.cmpi ne, %1, %c0_i32_0 : i32
    scf.if %2 {
      %c0_101 = arith.constant 0 : index
      %c0_102 = arith.constant 0 : index
      %c0_103 = arith.constant 0 : index
      %189 = vector.load %arg2[%c0_101, %c0_102, %c0_103] : memref<1x16x32xf32, #tpu.memory_space<vmem>>, vector<1x16x32xf32>
      %190 = vector.shape_cast %189 : vector<1x16x32xf32> to vector<16x32xf32>
      %c0_104 = arith.constant 0 : index
      %c0_105 = arith.constant 0 : index
      %191 = vector.load %arg21[%c0_104, %c0_105] : memref<16x32xf32, #tpu.memory_space<vmem>>, vector<16x32xf32>
      tpu.vector_store %arg21[%c0_104, %c0_105], %190 {strides = array<i32>} : memref<16x32xf32, #tpu.memory_space<vmem>>, vector<16x32xf32>,
    } else {
    }
    %c0 = arith.constant 0 : index
    %c0_1 = arith.constant 0 : index
    %3 = vector.load %arg21[%c0, %c0_1] : memref<16x32xf32, #tpu.memory_space<vmem>>, vector<16x32xf32>
    %c0_2 = arith.constant 0 : index
    %c0_3 = arith.constant 0 : index
    %c0_4 = arith.constant 0 : index
    %c0_5 = arith.constant 0 : index
    %4 = vector.load %arg3[%c0_2, %c0_3, %c0_4, %c0_5] : memref<1x1x16x16xf32, #tpu.memory_space<vmem>>, vector<1x1x16x16xf32>
    %5 = vector.shape_cast %4 : vector<1x1x16x16xf32> to vector<16x16xf32>
    %c0_6 = arith.constant 0 : index
    %c0_7 = arith.constant 0 : index
    %c0_8 = arith.constant 0 : index
    %6 = vector.load %arg4[%c0_6, %c0_7, %c0_8] : memref<1x1x32xf32, #tpu.memory_space<vmem>>, vector<1x1x32xf32>
    %7 = vector.shape_cast %6 : vector<1x1x32xf32> to vector<1x32xf32>
    %c0_9 = arith.constant 0 : index
    %c0_10 = arith.constant 0 : index
    %c0_11 = arith.constant 0 : index
    %8 = vector.load %arg5[%c0_9, %c0_10, %c0_11] : memref<1x1x32xf32, #tpu.memory_space<vmem>>, vector<1x1x32xf32>
    %9 = vector.shape_cast %8 : vector<1x1x32xf32> to vector<1x32xf32>
    %cst = arith.constant dense<0.000000e+00> : vector<16xf32>
    %10 = vector.multi_reduction <add>, %3, %cst [1] : vector<16x32xf32> to vector<16xf32>
    %11 = vector.shape_cast %10 : vector<16xf32> to vector<16x1xf32>
    %cst_12 = arith.constant 3.200000e+01 : f32
    %12 = vector.broadcast %cst_12 : f32 to vector<16x1xf32>
    %13 = arith.divf %11, %12 : vector<16x1xf32>
    %14 = vector.broadcast %13 : vector<16x1xf32> to vector<16x32xf32>
    %15 = arith.subf %3, %14 : vector<16x32xf32>
    %16 = arith.mulf %15, %15 : vector<16x32xf32>
    %cst_13 = arith.constant dense<0.000000e+00> : vector<16xf32>
    %17 = vector.multi_reduction <add>, %16, %cst_13 [1] : vector<16x32xf32> to vector<16xf32>
    %18 = vector.shape_cast %17 : vector<16xf32> to vector<16x1xf32>
    %cst_14 = arith.constant 3.200000e+01 : f32
    %19 = vector.broadcast %cst_14 : f32 to vector<16x1xf32>
    %20 = arith.divf %18, %19 : vector<16x1xf32>
    %21 = vector.broadcast %13 : vector<16x1xf32> to vector<16x32xf32>
    %22 = arith.subf %3, %21 : vector<16x32xf32>
    %cst_15 = arith.constant 9.99999996E-13 : f32
    %23 = vector.broadcast %cst_15 : f32 to vector<16x1xf32>
    %24 = arith.addf %20, %23 : vector<16x1xf32>
    %25 = math.rsqrt %24 : vector<16x1xf32>
    %26 = vector.broadcast %25 : vector<16x1xf32> to vector<16x32xf32>
    %27 = arith.mulf %22, %26 : vector<16x32xf32>
    %28 = vector.broadcast %7 : vector<1x32xf32> to vector<16x32xf32>
    %29 = arith.mulf %27, %28 : vector<16x32xf32>
    %30 = vector.broadcast %9 : vector<1x32xf32> to vector<16x32xf32>
    %31 = arith.addf %29, %30 : vector<16x32xf32>
    %c0_16 = arith.constant 0 : index
    %c0_17 = arith.constant 0 : index
    %c0_18 = arith.constant 0 : index
    %32 = vector.load %arg6[%c0_16, %c0_17, %c0_18] : memref<1x32x32xf32, #tpu.memory_space<vmem>>, vector<1x32x32xf32>
    %33 = vector.shape_cast %32 : vector<1x32x32xf32> to vector<32x32xf32>
    %cst_19 = arith.constant dense<0.000000e+00> : vector<16x32xf32>
    %34 = tpu.matmul %31, %33, %cst_19 {dimension_numbers = #tpu.dot_dimension_numbers<[1], [0], [0], [1], [0, 0, 1, 1], [], []>} : vector<16x32xf32>, vector<32x32xf32>, vector<16x32xf32> -> vector<16x32xf32>
    %c0_20 = arith.constant 0 : index
    %c0_21 = arith.constant 0 : index
    %c0_22 = arith.constant 0 : index
    %35 = vector.load %arg7[%c0_20, %c0_21, %c0_22] : memref<1x1x32xf32, #tpu.memory_space<vmem>>, vector<1x1x32xf32>
    %36 = vector.shape_cast %35 : vector<1x1x32xf32> to vector<1x32xf32>
    %37 = vector.broadcast %36 : vector<1x32xf32> to vector<16x32xf32>
    %38 = arith.addf %34, %37 : vector<16x32xf32>
    %c0_23 = arith.constant 0 : index
    %c0_24 = arith.constant 0 : index
    %c0_25 = arith.constant 0 : index
    %39 = vector.load %arg8[%c0_23, %c0_24, %c0_25] : memref<1x32x32xf32, #tpu.memory_space<vmem>>, vector<1x32x32xf32>
    %40 = vector.shape_cast %39 : vector<1x32x32xf32> to vector<32x32xf32>
    %cst_26 = arith.constant dense<0.000000e+00> : vector<16x32xf32>
    %41 = tpu.matmul %31, %40, %cst_26 {dimension_numbers = #tpu.dot_dimension_numbers<[1], [0], [0], [1], [0, 0, 1, 1], [], []>} : vector<16x32xf32>, vector<32x32xf32>, vector<16x32xf32> -> vector<16x32xf32>
    %c0_27 = arith.constant 0 : index
    %c0_28 = arith.constant 0 : index
    %c0_29 = arith.constant 0 : index
    %42 = vector.load %arg9[%c0_27, %c0_28, %c0_29] : memref<1x1x32xf32, #tpu.memory_space<vmem>>, vector<1x1x32xf32>
    %43 = vector.shape_cast %42 : vector<1x1x32xf32> to vector<1x32xf32>
    %44 = vector.broadcast %43 : vector<1x32xf32> to vector<16x32xf32>
    %45 = arith.addf %41, %44 : vector<16x32xf32>
    %c0_30 = arith.constant 0 : index
    %c0_31 = arith.constant 0 : index
    %c0_32 = arith.constant 0 : index
    %46 = vector.load %arg10[%c0_30, %c0_31, %c0_32] : memref<1x32x32xf32, #tpu.memory_space<vmem>>, vector<1x32x32xf32>
    %47 = vector.shape_cast %46 : vector<1x32x32xf32> to vector<32x32xf32>
    %cst_33 = arith.constant dense<0.000000e+00> : vector<16x32xf32>
    %48 = tpu.matmul %31, %47, %cst_33 {dimension_numbers = #tpu.dot_dimension_numbers<[1], [0], [0], [1], [0, 0, 1, 1], [], []>} : vector<16x32xf32>, vector<32x32xf32>, vector<16x32xf32> -> vector<16x32xf32>
    %c0_34 = arith.constant 0 : index
    %c0_35 = arith.constant 0 : index
    %c0_36 = arith.constant 0 : index
    %49 = vector.load %arg11[%c0_34, %c0_35, %c0_36] : memref<1x1x32xf32, #tpu.memory_space<vmem>>, vector<1x1x32xf32>
    %50 = vector.shape_cast %49 : vector<1x1x32xf32> to vector<1x32xf32>
    %51 = vector.broadcast %50 : vector<1x32xf32> to vector<16x32xf32>
    %52 = arith.addf %48, %51 : vector<16x32xf32>
    %53 = vector.extract_strided_slice %38 {offsets = [0, 0], sizes = [16, 8], strides = [1, 1]} : vector<16x32xf32> to vector<16x8xf32>
    %54 = vector.extract_strided_slice %45 {offsets = [0, 0], sizes = [16, 8], strides = [1, 1]} : vector<16x32xf32> to vector<16x8xf32>
    %55 = vector.extract_strided_slice %52 {offsets = [0, 0], sizes = [16, 8], strides = [1, 1]} : vector<16x32xf32> to vector<16x8xf32>
    %cst_37 = arith.constant dense<0.000000e+00> : vector<16x16xf32>
    %56 = tpu.matmul %53, %54, %cst_37 {dimension_numbers = #tpu.dot_dimension_numbers<[1], [1], [0], [0], [0, 0, 1, 0], [], []>} : vector<16x8xf32>, vector<16x8xf32>, vector<16x16xf32> -> vector<16x16xf32>
    %cst_38 = arith.constant 0.353553385 : f32
    %57 = vector.broadcast %cst_38 : f32 to vector<16x16xf32>
    %58 = arith.mulf %56, %57 : vector<16x16xf32>
    %cst_39 = arith.constant 0.000000e+00 : f32
    %59 = vector.broadcast %cst_39 : f32 to vector<16x16xf32>
    %60 = arith.cmpf oeq, %5, %59 : vector<16x16xf32>
    %cst_40 = arith.constant -1.000000e+09 : f32
    %61 = vector.broadcast %cst_40 : f32 to vector<16x16xf32>
    %62 = arith.select %60, %61, %58 : vector<16x16xi1>, vector<16x16xf32>
    %cst_41 = arith.constant dense<0xFF800000> : vector<16xf32>
    %63 = vector.multi_reduction <maximumf>, %62, %cst_41 [1] : vector<16x16xf32> to vector<16xf32>
    %64 = vector.shape_cast %63 : vector<16xf32> to vector<16x1xf32>
    %65 = vector.broadcast %64 : vector<16x1xf32> to vector<16x16xf32>
    %66 = arith.subf %62, %65 : vector<16x16xf32>
    %67 = math.exp %66 : vector<16x16xf32>
    %cst_42 = arith.constant dense<0.000000e+00> : vector<16xf32>
    %68 = vector.multi_reduction <add>, %67, %cst_42 [1] : vector<16x16xf32> to vector<16xf32>
    %69 = vector.shape_cast %68 : vector<16xf32> to vector<16x1xf32>
    %70 = vector.broadcast %69 : vector<16x1xf32> to vector<16x16xf32>
    %71 = arith.divf %67, %70 : vector<16x16xf32>
    %cst_43 = arith.constant dense<0.000000e+00> : vector<16x8xf32>
    %72 = tpu.matmul %71, %55, %cst_43 {dimension_numbers = #tpu.dot_dimension_numbers<[1], [0], [0], [1], [0, 0, 1, 1], [], []>} : vector<16x16xf32>, vector<16x8xf32>, vector<16x8xf32> -> vector<16x8xf32>
    %73 = vector.extract_strided_slice %38 {offsets = [0, 8], sizes = [16, 8], strides = [1, 1]} : vector<16x32xf32> to vector<16x8xf32>
    %74 = vector.extract_strided_slice %45 {offsets = [0, 8], sizes = [16, 8], strides = [1, 1]} : vector<16x32xf32> to vector<16x8xf32>
    %75 = vector.extract_strided_slice %52 {offsets = [0, 8], sizes = [16, 8], strides = [1, 1]} : vector<16x32xf32> to vector<16x8xf32>
    %cst_44 = arith.constant dense<0.000000e+00> : vector<16x16xf32>
    %76 = tpu.matmul %73, %74, %cst_44 {dimension_numbers = #tpu.dot_dimension_numbers<[1], [1], [0], [0], [0, 0, 1, 0], [], []>} : vector<16x8xf32>, vector<16x8xf32>, vector<16x16xf32> -> vector<16x16xf32>
    %cst_45 = arith.constant 0.353553385 : f32
    %77 = vector.broadcast %cst_45 : f32 to vector<16x16xf32>
    %78 = arith.mulf %76, %77 : vector<16x16xf32>
    %cst_46 = arith.constant 0.000000e+00 : f32
    %79 = vector.broadcast %cst_46 : f32 to vector<16x16xf32>
    %80 = arith.cmpf oeq, %5, %79 : vector<16x16xf32>
    %cst_47 = arith.constant -1.000000e+09 : f32
    %81 = vector.broadcast %cst_47 : f32 to vector<16x16xf32>
    %82 = arith.select %80, %81, %78 : vector<16x16xi1>, vector<16x16xf32>
    %cst_48 = arith.constant dense<0xFF800000> : vector<16xf32>
    %83 = vector.multi_reduction <maximumf>, %82, %cst_48 [1] : vector<16x16xf32> to vector<16xf32>
    %84 = vector.shape_cast %83 : vector<16xf32> to vector<16x1xf32>
    %85 = vector.broadcast %84 : vector<16x1xf32> to vector<16x16xf32>
    %86 = arith.subf %82, %85 : vector<16x16xf32>
    %87 = math.exp %86 : vector<16x16xf32>
    %cst_49 = arith.constant dense<0.000000e+00> : vector<16xf32>
    %88 = vector.multi_reduction <add>, %87, %cst_49 [1] : vector<16x16xf32> to vector<16xf32>
    %89 = vector.shape_cast %88 : vector<16xf32> to vector<16x1xf32>
    %90 = vector.broadcast %89 : vector<16x1xf32> to vector<16x16xf32>
    %91 = arith.divf %87, %90 : vector<16x16xf32>
    %cst_50 = arith.constant dense<0.000000e+00> : vector<16x8xf32>
    %92 = tpu.matmul %91, %75, %cst_50 {dimension_numbers = #tpu.dot_dimension_numbers<[1], [0], [0], [1], [0, 0, 1, 1], [], []>} : vector<16x16xf32>, vector<16x8xf32>, vector<16x8xf32> -> vector<16x8xf32>
    %93 = vector.extract_strided_slice %38 {offsets = [0, 16], sizes = [16, 8], strides = [1, 1]} : vector<16x32xf32> to vector<16x8xf32>
    %94 = vector.extract_strided_slice %45 {offsets = [0, 16], sizes = [16, 8], strides = [1, 1]} : vector<16x32xf32> to vector<16x8xf32>
    %95 = vector.extract_strided_slice %52 {offsets = [0, 16], sizes = [16, 8], strides = [1, 1]} : vector<16x32xf32> to vector<16x8xf32>
    %cst_51 = arith.constant dense<0.000000e+00> : vector<16x16xf32>
    %96 = tpu.matmul %93, %94, %cst_51 {dimension_numbers = #tpu.dot_dimension_numbers<[1], [1], [0], [0], [0, 0, 1, 0], [], []>} : vector<16x8xf32>, vector<16x8xf32>, vector<16x16xf32> -> vector<16x16xf32>
    %cst_52 = arith.constant 0.353553385 : f32
    %97 = vector.broadcast %cst_52 : f32 to vector<16x16xf32>
    %98 = arith.mulf %96, %97 : vector<16x16xf32>
    %cst_53 = arith.constant 0.000000e+00 : f32
    %99 = vector.broadcast %cst_53 : f32 to vector<16x16xf32>
    %100 = arith.cmpf oeq, %5, %99 : vector<16x16xf32>
    %cst_54 = arith.constant -1.000000e+09 : f32
    %101 = vector.broadcast %cst_54 : f32 to vector<16x16xf32>
    %102 = arith.select %100, %101, %98 : vector<16x16xi1>, vector<16x16xf32>
    %cst_55 = arith.constant dense<0xFF800000> : vector<16xf32>
    %103 = vector.multi_reduction <maximumf>, %102, %cst_55 [1] : vector<16x16xf32> to vector<16xf32>
    %104 = vector.shape_cast %103 : vector<16xf32> to vector<16x1xf32>
    %105 = vector.broadcast %104 : vector<16x1xf32> to vector<16x16xf32>
    %106 = arith.subf %102, %105 : vector<16x16xf32>
    %107 = math.exp %106 : vector<16x16xf32>
    %cst_56 = arith.constant dense<0.000000e+00> : vector<16xf32>
    %108 = vector.multi_reduction <add>, %107, %cst_56 [1] : vector<16x16xf32> to vector<16xf32>
    %109 = vector.shape_cast %108 : vector<16xf32> to vector<16x1xf32>
    %110 = vector.broadcast %109 : vector<16x1xf32> to vector<16x16xf32>
    %111 = arith.divf %107, %110 : vector<16x16xf32>
    %cst_57 = arith.constant dense<0.000000e+00> : vector<16x8xf32>
    %112 = tpu.matmul %111, %95, %cst_57 {dimension_numbers = #tpu.dot_dimension_numbers<[1], [0], [0], [1], [0, 0, 1, 1], [], []>} : vector<16x16xf32>, vector<16x8xf32>, vector<16x8xf32> -> vector<16x8xf32>
    %113 = vector.extract_strided_slice %38 {offsets = [0, 24], sizes = [16, 8], strides = [1, 1]} : vector<16x32xf32> to vector<16x8xf32>
    %114 = vector.extract_strided_slice %45 {offsets = [0, 24], sizes = [16, 8], strides = [1, 1]} : vector<16x32xf32> to vector<16x8xf32>
    %115 = vector.extract_strided_slice %52 {offsets = [0, 24], sizes = [16, 8], strides = [1, 1]} : vector<16x32xf32> to vector<16x8xf32>
    %cst_58 = arith.constant dense<0.000000e+00> : vector<16x16xf32>
    %116 = tpu.matmul %113, %114, %cst_58 {dimension_numbers = #tpu.dot_dimension_numbers<[1], [1], [0], [0], [0, 0, 1, 0], [], []>} : vector<16x8xf32>, vector<16x8xf32>, vector<16x16xf32> -> vector<16x16xf32>
    %cst_59 = arith.constant 0.353553385 : f32
    %117 = vector.broadcast %cst_59 : f32 to vector<16x16xf32>
    %118 = arith.mulf %116, %117 : vector<16x16xf32>
    %cst_60 = arith.constant 0.000000e+00 : f32
    %119 = vector.broadcast %cst_60 : f32 to vector<16x16xf32>
    %120 = arith.cmpf oeq, %5, %119 : vector<16x16xf32>
    %cst_61 = arith.constant -1.000000e+09 : f32
    %121 = vector.broadcast %cst_61 : f32 to vector<16x16xf32>
    %122 = arith.select %120, %121, %118 : vector<16x16xi1>, vector<16x16xf32>
    %cst_62 = arith.constant dense<0xFF800000> : vector<16xf32>
    %123 = vector.multi_reduction <maximumf>, %122, %cst_62 [1] : vector<16x16xf32> to vector<16xf32>
    %124 = vector.shape_cast %123 : vector<16xf32> to vector<16x1xf32>
    %125 = vector.broadcast %124 : vector<16x1xf32> to vector<16x16xf32>
    %126 = arith.subf %122, %125 : vector<16x16xf32>
    %127 = math.exp %126 : vector<16x16xf32>
    %cst_63 = arith.constant dense<0.000000e+00> : vector<16xf32>
    %128 = vector.multi_reduction <add>, %127, %cst_63 [1] : vector<16x16xf32> to vector<16xf32>
    %129 = vector.shape_cast %128 : vector<16xf32> to vector<16x1xf32>
    %130 = vector.broadcast %129 : vector<16x1xf32> to vector<16x16xf32>
    %131 = arith.divf %127, %130 : vector<16x16xf32>
    %cst_64 = arith.constant dense<0.000000e+00> : vector<16x8xf32>
    %132 = tpu.matmul %131, %115, %cst_64 {dimension_numbers = #tpu.dot_dimension_numbers<[1], [0], [0], [1], [0, 0, 1, 1], [], []>} : vector<16x16xf32>, vector<16x8xf32>, vector<16x8xf32> -> vector<16x8xf32>
    %133 = tpu.concatenate %72, %92, %112, %132 in 1 : vector<16x8xf32>, vector<16x8xf32>, vector<16x8xf32>, vector<16x8xf32> -> vector<16x32xf32>
    %c0_65 = arith.constant 0 : index
    %c0_66 = arith.constant 0 : index
    %c0_67 = arith.constant 0 : index
    %134 = vector.load %arg12[%c0_65, %c0_66, %c0_67] : memref<1x32x32xf32, #tpu.memory_space<vmem>>, vector<1x32x32xf32>
    %135 = vector.shape_cast %134 : vector<1x32x32xf32> to vector<32x32xf32>
    %cst_68 = arith.constant dense<0.000000e+00> : vector<16x32xf32>
    %136 = tpu.matmul %133, %135, %cst_68 {dimension_numbers = #tpu.dot_dimension_numbers<[1], [0], [0], [1], [0, 0, 1, 1], [], []>} : vector<16x32xf32>, vector<32x32xf32>, vector<16x32xf32> -> vector<16x32xf32>
    %c0_69 = arith.constant 0 : index
    %c0_70 = arith.constant 0 : index
    %c0_71 = arith.constant 0 : index
    %137 = vector.load %arg13[%c0_69, %c0_70, %c0_71] : memref<1x1x32xf32, #tpu.memory_space<vmem>>, vector<1x1x32xf32>
    %138 = vector.shape_cast %137 : vector<1x1x32xf32> to vector<1x32xf32>
    %139 = vector.broadcast %138 : vector<1x32xf32> to vector<16x32xf32>
    %140 = arith.addf %136, %139 : vector<16x32xf32>
    %141 = arith.addf %31, %140 : vector<16x32xf32>
    %c0_72 = arith.constant 0 : index
    %c0_73 = arith.constant 0 : index
    %c0_74 = arith.constant 0 : index
    %142 = vector.load %arg14[%c0_72, %c0_73, %c0_74] : memref<1x1x32xf32, #tpu.memory_space<vmem>>, vector<1x1x32xf32>
    %143 = vector.shape_cast %142 : vector<1x1x32xf32> to vector<1x32xf32>
    %c0_75 = arith.constant 0 : index
    %c0_76 = arith.constant 0 : index
    %c0_77 = arith.constant 0 : index
    %144 = vector.load %arg15[%c0_75, %c0_76, %c0_77] : memref<1x1x32xf32, #tpu.memory_space<vmem>>, vector<1x1x32xf32>
    %145 = vector.shape_cast %144 : vector<1x1x32xf32> to vector<1x32xf32>
    %cst_78 = arith.constant dense<0.000000e+00> : vector<16xf32>
    %146 = vector.multi_reduction <add>, %141, %cst_78 [1] : vector<16x32xf32> to vector<16xf32>
    %147 = vector.shape_cast %146 : vector<16xf32> to vector<16x1xf32>
    %cst_79 = arith.constant 3.200000e+01 : f32
    %148 = vector.broadcast %cst_79 : f32 to vector<16x1xf32>
    %149 = arith.divf %147, %148 : vector<16x1xf32>
    %150 = vector.broadcast %149 : vector<16x1xf32> to vector<16x32xf32>
    %151 = arith.subf %141, %150 : vector<16x32xf32>
    %152 = arith.mulf %151, %151 : vector<16x32xf32>
    %cst_80 = arith.constant dense<0.000000e+00> : vector<16xf32>
    %153 = vector.multi_reduction <add>, %152, %cst_80 [1] : vector<16x32xf32> to vector<16xf32>
    %154 = vector.shape_cast %153 : vector<16xf32> to vector<16x1xf32>
    %cst_81 = arith.constant 3.200000e+01 : f32
    %155 = vector.broadcast %cst_81 : f32 to vector<16x1xf32>
    %156 = arith.divf %154, %155 : vector<16x1xf32>
    %157 = vector.broadcast %149 : vector<16x1xf32> to vector<16x32xf32>
    %158 = arith.subf %141, %157 : vector<16x32xf32>
    %cst_82 = arith.constant 9.99999996E-13 : f32
    %159 = vector.broadcast %cst_82 : f32 to vector<16x1xf32>
    %160 = arith.addf %156, %159 : vector<16x1xf32>
    %161 = math.rsqrt %160 : vector<16x1xf32>
    %162 = vector.broadcast %161 : vector<16x1xf32> to vector<16x32xf32>
    %163 = arith.mulf %158, %162 : vector<16x32xf32>
    %164 = vector.broadcast %143 : vector<1x32xf32> to vector<16x32xf32>
    %165 = arith.mulf %163, %164 : vector<16x32xf32>
    %166 = vector.broadcast %145 : vector<1x32xf32> to vector<16x32xf32>
    %167 = arith.addf %165, %166 : vector<16x32xf32>
    %c0_83 = arith.constant 0 : index
    %c0_84 = arith.constant 0 : index
    %c0_85 = arith.constant 0 : index
    %168 = vector.load %arg16[%c0_83, %c0_84, %c0_85] : memref<1x32x128xf32, #tpu.memory_space<vmem>>, vector<1x32x128xf32>
    %169 = vector.shape_cast %168 : vector<1x32x128xf32> to vector<32x128xf32>
    %cst_86 = arith.constant dense<0.000000e+00> : vector<16x128xf32>
    %170 = tpu.matmul %167, %169, %cst_86 {dimension_numbers = #tpu.dot_dimension_numbers<[1], [0], [0], [1], [0, 0, 1, 1], [], []>} : vector<16x32xf32>, vector<32x128xf32>, vector<16x128xf32> -> vector<16x128xf32>
    %c0_87 = arith.constant 0 : index
    %c0_88 = arith.constant 0 : index
    %c0_89 = arith.constant 0 : index
    %171 = vector.load %arg17[%c0_87, %c0_88, %c0_89] : memref<1x1x128xf32, #tpu.memory_space<vmem>>, vector<1x1x128xf32>
    %172 = vector.shape_cast %171 : vector<1x1x128xf32> to vector<1x128xf32>
    %173 = vector.broadcast %172 : vector<1x128xf32> to vector<16x128xf32>
    %174 = arith.addf %170, %173 : vector<16x128xf32>
    %cst_90 = arith.constant 0.000000e+00 : f32
    %175 = vector.broadcast %cst_90 : f32 to vector<16x128xf32>
    %176 = arith.maximumf %174, %175 : vector<16x128xf32>
    %c0_91 = arith.constant 0 : index
    %c0_92 = arith.constant 0 : index
    %c0_93 = arith.constant 0 : index
    %177 = vector.load %arg18[%c0_91, %c0_92, %c0_93] : memref<1x128x32xf32, #tpu.memory_space<vmem>>, vector<1x128x32xf32>
    %178 = vector.shape_cast %177 : vector<1x128x32xf32> to vector<128x32xf32>
    %cst_94 = arith.constant dense<0.000000e+00> : vector<16x32xf32>
    %179 = tpu.matmul %176, %178, %cst_94 {dimension_numbers = #tpu.dot_dimension_numbers<[1], [0], [0], [1], [0, 0, 1, 1], [], []>} : vector<16x128xf32>, vector<128x32xf32>, vector<16x32xf32> -> vector<16x32xf32>
    %c0_95 = arith.constant 0 : index
    %c0_96 = arith.constant 0 : index
    %c0_97 = arith.constant 0 : index
    %180 = vector.load %arg19[%c0_95, %c0_96, %c0_97] : memref<1x1x32xf32, #tpu.memory_space<vmem>>, vector<1x1x32xf32>
    %181 = vector.shape_cast %180 : vector<1x1x32xf32> to vector<1x32xf32>
    %182 = vector.broadcast %181 : vector<1x32xf32> to vector<16x32xf32>
    %183 = arith.addf %179, %182 : vector<16x32xf32>
    %184 = arith.addf %167, %183 : vector<16x32xf32>
    %c0_98 = arith.constant 0 : index
    %c0_99 = arith.constant 0 : index
    %185 = vector.load %arg21[%c0_98, %c0_99] : memref<16x32xf32, #tpu.memory_space<vmem>>, vector<16x32xf32>
    tpu.vector_store %arg21[%c0_98, %c0_99], %184 {strides = array<i32>} : memref<16x32xf32, #tpu.memory_space<vmem>>, vector<16x32xf32>,
    %c1_i32 = arith.constant 1 : i32
    %186 = arith.cmpi eq, %arg1, %c1_i32 : i32
    %187 = arith.extui %186 : i1 to i32
    %c0_i32_100 = arith.constant 0 : i32
    %188 = arith.cmpi ne, %187, %c0_i32_100 : i32
    scf.if %188 {
      %c0_101 = arith.constant 0 : index
      %c0_102 = arith.constant 0 : index
      %c0_103 = arith.constant 0 : index
      %189 = vector.load %arg20[%c0_101, %c0_102, %c0_103] : memref<1x16x32xf32, #tpu.memory_space<vmem>>, vector<1x16x32xf32>
      %190 = vector.shape_cast %189 : vector<1x16x32xf32> to vector<16x32xf32>
      %191 = vector.shape_cast %184 : vector<16x32xf32> to vector<1x16x32xf32>
      tpu.vector_store %arg20[%c0_101, %c0_102, %c0_103], %191 {strides = array<i32>} : memref<1x16x32xf32, #tpu.memory_space<vmem>>, vector<1x16x32xf32>,
    } else {
    }
    return
  }
  func.func @transform_0(%arg0: i32, %arg1: i32) -> (i32, i32, i32) {
    %c0_i32 = arith.constant 0 : i32
    %c0_i32_0 = arith.constant 0 : i32
    %c0_i32_1 = arith.constant 0 : i32
    return %arg0, %c0_i32, %c0_i32_0 : i32, i32, i32
  }
  func.func @transform_1(%arg0: i32, %arg1: i32) -> (i32, i32, i32, i32) {
    %c0_i32 = arith.constant 0 : i32
    %c0_i32_0 = arith.constant 0 : i32
    %c0_i32_1 = arith.constant 0 : i32
    %c0_i32_2 = arith.constant 0 : i32
    return %arg0, %c0_i32, %c0_i32_0, %c0_i32_1 : i32, i32, i32, i32
  }
  func.func @transform_2(%arg0: i32, %arg1: i32) -> (i32, i32, i32) {
    %c0_i32 = arith.constant 0 : i32
    %c0_i32_0 = arith.constant 0 : i32
    %c0_i32_1 = arith.constant 0 : i32
    return %arg1, %c0_i32, %c0_i32_0 : i32, i32, i32
  }
  func.func @transform_3(%arg0: i32, %arg1: i32) -> (i32, i32, i32) {
    %c0_i32 = arith.constant 0 : i32
    %c0_i32_0 = arith.constant 0 : i32
    %c0_i32_1 = arith.constant 0 : i32
    return %arg1, %c0_i32, %c0_i32_0 : i32, i32, i32
  }
  func.func @transform_4(%arg0: i32, %arg1: i32) -> (i32, i32, i32) {
    %c0_i32 = arith.constant 0 : i32
    %c0_i32_0 = arith.constant 0 : i32
    %c0_i32_1 = arith.constant 0 : i32
    return %arg1, %c0_i32, %c0_i32_0 : i32, i32, i32
  }
  func.func @transform_5(%arg0: i32, %arg1: i32) -> (i32, i32, i32) {
    %c0_i32 = arith.constant 0 : i32
    %c0_i32_0 = arith.constant 0 : i32
    %c0_i32_1 = arith.constant 0 : i32
    return %arg1, %c0_i32, %c0_i32_0 : i32, i32, i32
  }
  func.func @transform_6(%arg0: i32, %arg1: i32) -> (i32, i32, i32) {
    %c0_i32 = arith.constant 0 : i32
    %c0_i32_0 = arith.constant 0 : i32
    %c0_i32_1 = arith.constant 0 : i32
    return %arg1, %c0_i32, %c0_i32_0 : i32, i32, i32
  }
  func.func @transform_7(%arg0: i32, %arg1: i32) -> (i32, i32, i32) {
    %c0_i32 = arith.constant 0 : i32
    %c0_i32_0 = arith.constant 0 : i32
    %c0_i32_1 = arith.constant 0 : i32
    return %arg1, %c0_i32, %c0_i32_0 : i32, i32, i32
  }
  func.func @transform_8(%arg0: i32, %arg1: i32) -> (i32, i32, i32) {
    %c0_i32 = arith.constant 0 : i32
    %c0_i32_0 = arith.constant 0 : i32
    %c0_i32_1 = arith.constant 0 : i32
    return %arg1, %c0_i32, %c0_i32_0 : i32, i32, i32
  }
  func.func @transform_9(%arg0: i32, %arg1: i32) -> (i32, i32, i32) {
    %c0_i32 = arith.constant 0 : i32
    %c0_i32_0 = arith.constant 0 : i32
    %c0_i32_1 = arith.constant 0 : i32
    return %arg1, %c0_i32, %c0_i32_0 : i32, i32, i32
  }
  func.func @transform_10(%arg0: i32, %arg1: i32) -> (i32, i32, i32) {
    %c0_i32 = arith.constant 0 : i32
    %c0_i32_0 = arith.constant 0 : i32
    %c0_i32_1 = arith.constant 0 : i32
    return %arg1, %c0_i32, %c0_i32_0 : i32, i32, i32
  }
  func.func @transform_11(%arg0: i32, %arg1: i32) -> (i32, i32, i32) {
    %c0_i32 = arith.constant 0 : i32
    %c0_i32_0 = arith.constant 0 : i32
    %c0_i32_1 = arith.constant 0 : i32
    return %arg1, %c0_i32, %c0_i32_0 : i32, i32, i32
  }
  func.func @transform_12(%arg0: i32, %arg1: i32) -> (i32, i32, i32) {
    %c0_i32 = arith.constant 0 : i32
    %c0_i32_0 = arith.constant 0 : i32
    %c0_i32_1 = arith.constant 0 : i32
    return %arg1, %c0_i32, %c0_i32_0 : i32, i32, i32
  }
  func.func @transform_13(%arg0: i32, %arg1: i32) -> (i32, i32, i32) {
    %c0_i32 = arith.constant 0 : i32
    %c0_i32_0 = arith.constant 0 : i32
    %c0_i32_1 = arith.constant 0 : i32
    return %arg1, %c0_i32, %c0_i32_0 : i32, i32, i32
  }
  func.func @transform_14(%arg0: i32, %arg1: i32) -> (i32, i32, i32) {
    %c0_i32 = arith.constant 0 : i32
    %c0_i32_0 = arith.constant 0 : i32
    %c0_i32_1 = arith.constant 0 : i32
    return %arg1, %c0_i32, %c0_i32_0 : i32, i32, i32
  }
  func.func @transform_15(%arg0: i32, %arg1: i32) -> (i32, i32, i32) {
    %c0_i32 = arith.constant 0 : i32
    %c0_i32_0 = arith.constant 0 : i32
    %c0_i32_1 = arith.constant 0 : i32
    return %arg1, %c0_i32, %c0_i32_0 : i32, i32, i32
  }
  func.func @transform_16(%arg0: i32, %arg1: i32) -> (i32, i32, i32) {
    %c0_i32 = arith.constant 0 : i32
    %c0_i32_0 = arith.constant 0 : i32
    %c0_i32_1 = arith.constant 0 : i32
    return %arg1, %c0_i32, %c0_i32_0 : i32, i32, i32
  }
  func.func @transform_17(%arg0: i32, %arg1: i32) -> (i32, i32, i32) {
    %c0_i32 = arith.constant 0 : i32
    %c0_i32_0 = arith.constant 0 : i32
    %c0_i32_1 = arith.constant 0 : i32
    return %arg1, %c0_i32, %c0_i32_0 : i32, i32, i32
  }
  func.func @transform_18(%arg0: i32, %arg1: i32) -> (i32, i32, i32) {
    %c0_i32 = arith.constant 0 : i32
    %c0_i32_0 = arith.constant 0 : i32
    %c0_i32_1 = arith.constant 0 : i32
    return %arg0, %c0_i32, %c0_i32_0 : i32, i32, i32
  }
}

</mosaic_0001>

<llo_original>
// kernel: tpu_custom_call.1
$region0: #{tpu_custom_call.1}
  #allocation0 [shape = 'u32[]', space=smem, size = 0x4, offset = 0x4, fixed_abs, tag = 'smem constant byte address 0x4 - core index']
  #allocation1 [shape = 'u32[144,128]{1,0:T(1,128)}', space=vmem, size = 0x12000, scoped, tag = 'internal scratch']
  #allocation2 [shape = 'f32[16,32]{1,0:T(8,128)}', space=vmem, size = 0x2000, scoped, tag = 'scratch operand']
  %s0 = inlined_call_operand.hbm [shape: f32[2,16,32], index: 0, kind: input, shape index: {}]
  %s1 = inlined_call_operand.hbm [shape: f32[2,1,16,16], index: 1, kind: input, shape index: {}]
  %s2 = inlined_call_operand.vmem [shape: f32[2,1,32], index: 2, kind: input, shape index: {}]
  %s3 = inlined_call_operand.hbm [shape: f32[2,1,32], index: 3, kind: input, shape index: {}]
  %s4 = inlined_call_operand.vmem [shape: f32[2,32,32], index: 4, kind: input, shape index: {}]
  %s5 = inlined_call_operand.vmem [shape: f32[2,1,32], index: 5, kind: input, shape index: {}]
  %s6 = inlined_call_operand.vmem [shape: f32[2,32,32], index: 6, kind: input, shape index: {}]
  %s7 = inlined_call_operand.vmem [shape: f32[2,1,32], index: 7, kind: input, shape index: {}]
  %s8 = inlined_call_operand.vmem [shape: f32[2,32,32], index: 8, kind: input, shape index: {}]
  %s9 = inlined_call_operand.vmem [shape: f32[2,1,32], index: 9, kind: input, shape index: {}]
  %s10 = inlined_call_operand.vmem [shape: f32[2,32,32], index: 10, kind: input, shape index: {}]
  %s11 = inlined_call_operand.vmem [shape: f32[2,1,32], index: 11, kind: input, shape index: {}]
  %s12 = inlined_call_operand.vmem [shape: f32[2,1,32], index: 12, kind: input, shape index: {}]
  %s13 = inlined_call_operand.vmem [shape: f32[2,1,32], index: 13, kind: input, shape index: {}]
  %s14 = inlined_call_operand.vmem [shape: f32[2,32,128], index: 14, kind: input, shape index: {}]
  %s15 = inlined_call_operand.vmem [shape: f32[2,1,128], index: 15, kind: input, shape index: {}]
  %s16 = inlined_call_operand.vmem [shape: f32[2,128,32], index: 16, kind: input, shape index: {}]
  %s17 = inlined_call_operand.vmem [shape: f32[2,1,32], index: 17, kind: input, shape index: {}]
  %s18 = inlined_call_operand.hbm [shape: f32[2,16,32], index: 18, kind: output, shape index: {}]
  %s19 = sld [smem:[#allocation0]]
  $region125: #{tpu_custom_call.1} parent=0
    _
  %s21 = ssub.s32 1, %s19
  %s22 = scalar_select 0, %s21, %s19
  $region1: #{tpu_custom_call.1} parent=0
    #allocation3 [shape = 'u8[16384]{0}', space=vmem, size = 0x4000, scoped, tag = 'input window, operand 0']
    #allocation4 [shape = 's32[2]{0}', space=sflag, size = 0x8, scoped, tag = 'scoped memory for tpu_custom_call.1']
    #allocation5 [shape = 's32[2]{0}', space=sflag, size = 0x8, scoped, tag = 'scoped memory for tpu_custom_call.1']
    #allocation6 [shape = 'u8[16384]{0}', space=vmem, size = 0x4000, scoped, tag = 'input window, operand 1']
    #allocation7 [shape = 's32[2]{0}', space=sflag, size = 0x8, scoped, tag = 'scoped memory for tpu_custom_call.1']
    #allocation8 [shape = 'u8[1024]{0}', space=vmem, size = 0x400, scoped, tag = 'input window, operand 3']
    #allocation9 [shape = 'u8[16384]{0}', space=vmem, size = 0x4000, scoped, tag = 'output window, operand 0']
    %23 = vsyncpa [#allocation4], 0
    %s24 = scalar_lea.sflag [#allocation4], 1
    %25 = vsyncpa %s24, 0
    %26 = vsyncpa [#allocation7], 0
    %s27 = scalar_lea.sflag [#allocation7], 1
    %28 = vsyncpa %s27, 0
    %29 = vsyncpa [#allocation5], 0
    %s30 = scalar_lea.sflag [#allocation5], 1
    %31 = vsyncpa %s30, 0
    loop: start=0, step=1, limit=6
    $region2: #{tpu_custom_call.1} parent=1 // loop_pre_header
      _
    $region3: #{tpu_custom_call.1} parent=1 // loop_header
      %s33 = sphi 0, %s37
      %p34 = scmp.ge.s32.totalorder %s33, 6
      %s40 = sphi 0, %s52
      %s41 = sphi 0, %s48
      %s42 = sphi 0, %s40
      %s43 = sphi 0, %s41
      %s44 = sphi 0, %s42
      %s45 = sphi 0, %s43
      %s55 = sphi 0, %s57
      %s58 = sphi 0, %s55
      %s59 = sphi 0, %s58
      %s75 = sphi 0, %s59
      %s81 = sphi 0, %s83
      %s84 = sphi 0, %s81
      %s85 = sphi 0, %s84
      %s101 = sphi 0, %s85
      %s107 = sphi 0, %s109
      %s110 = sphi 0, %s107
      %s111 = sphi 0, %s110
      %s127 = sphi 0, %s111
      %s133 = sphi 0, %s135
      %s136 = sphi 0, %s133
      %s137 = sphi 0, %s136
      %s153 = sphi 0, %s137
      %s159 = sphi 0, %s161
      %s162 = sphi 0, %s159
      %s163 = sphi 0, %s162
      %s179 = sphi 0, %s163
      %s185 = sphi 0, %s187
      %s188 = sphi 0, %s185
      %s189 = sphi 0, %s188
      %s205 = sphi 0, %s189
      %s211 = sphi 0, %s213
      %s214 = sphi 0, %s211
      %s215 = sphi 0, %s214
      %s231 = sphi 0, %s215
      %s237 = sphi 0, %s239
      %s240 = sphi 0, %s237
      %s241 = sphi 0, %s240
      %s257 = sphi 0, %s241
      %s263 = sphi 0, %s265
      %s266 = sphi 0, %s263
      %s267 = sphi 0, %s266
      %s283 = sphi 0, %s267
      %s289 = sphi 0, %s291
      %s292 = sphi 0, %s289
      %s293 = sphi 0, %s292
      %s309 = sphi 0, %s293
      %s315 = sphi 0, %s317
      %s318 = sphi 0, %s315
      %s319 = sphi 0, %s318
      %s335 = sphi 0, %s319
      %s341 = sphi 0, %s343
      %s344 = sphi 0, %s341
      %s345 = sphi 0, %s344
      %s361 = sphi 0, %s345
      %s367 = sphi 0, %s369
      %s370 = sphi 0, %s367
      %s371 = sphi 0, %s370
      %s387 = sphi 0, %s371
      %s393 = sphi 0, %s395
      %s396 = sphi 0, %s393
      %s397 = sphi 0, %s396
      %s413 = sphi 0, %s397
      %s419 = sphi 0, %s421
      %s422 = sphi 0, %s419
      %s423 = sphi 0, %s422
      %s439 = sphi 0, %s423
      %s445 = sphi 0, %s447
      %s448 = sphi 0, %s445
      %s449 = sphi 0, %s448
      %s465 = sphi 0, %s449
      %s471 = sphi 0, %s473
      %s474 = sphi 0, %s471
      %s475 = sphi 0, %s474
      %s491 = sphi 0, %s475
      %s497 = sphi 0, %s499
      %s500 = sphi 0, %s497
      %s501 = sphi 0, %s500
      %s517 = sphi 0, %s501
      %s523 = sphi 0, %s525
      %s526 = sphi 0, %s523
      %s527 = sphi 0, %s526
      %s543 = sphi 0, %s527
    $region4: #{tpu_custom_call.1} parent=1 // loop_header_branch
      %36 = sbr.rel (%p34) target = $region8
    $region5: #{tpu_custom_call.1} parent=1 // loop_body
      %s38 = ssub.s32 %s33, 1
      %s39 = ssub.s32 %s33, 2
      %s46 = sadd.s32 1, %s41
      %p47 = scmp.ge.s32.totalorder %s46, 2
      %s48 = scalar_select %p47, 0, %s46
      %s49 = sadd.s32 1, %s40
      %s50 = scalar_select %p47, %s49, %s40
      %p51 = scmp.ge.s32.totalorder %s50, 2
      %s52 = scalar_select %p51, 0, %s50
      %s53 = ssub.s32 %s40, %s52
      %p54 = scmp.eq.s32.totalorder %s53, 0
      %s56 = sadd.s32 %s55, 1
      %s57 = scalar_select %p54, %s55, %s56
      %p60 = pneg %p54
      %p61 = scmp.eq.s32.totalorder %s33, 3
      %p62 = por %p60, %p61
      %p63 = scmp.ne.s32.totalorder %s55, %s58
      %p64 = scmp.eq.s32.totalorder %s33, 0
      %p65 = por %p63, %p64
      %p66 = scmp.ne.s32.totalorder %s55, %s58
      %p67 = scmp.eq.s32.totalorder %s38, 3
      %p68 = por %p66, %p67
      %p69 = scmp.ne.s32.totalorder %s58, %s59
      %p70 = scmp.eq.s32.totalorder %s38, 0
      %p71 = por %p69, %p70
      %p72 = scmp.ne.s32.totalorder %s58, %s59
      %p73 = scmp.eq.s32.totalorder %s39, 3
      %p74 = por %p72, %p73
      %p76 = scmp.ne.s32.totalorder %s59, %s75
      %p77 = scmp.eq.s32.totalorder %s39, 0
      %p78 = por %p76, %p77
      %s79 = ssub.s32 %s40, %s52
      %p80 = scmp.eq.s32.totalorder %s79, 0
      %s82 = sadd.s32 %s81, 1
      %s83 = scalar_select %p80, %s81, %s82
      %p86 = pneg %p80
      %p87 = scmp.eq.s32.totalorder %s33, 3
      %p88 = por %p86, %p87
      %p89 = scmp.ne.s32.totalorder %s81, %s84
      %p90 = scmp.eq.s32.totalorder %s33, 0
      %p91 = por %p89, %p90
      %p92 = scmp.ne.s32.totalorder %s81, %s84
      %p93 = scmp.eq.s32.totalorder %s38, 3
      %p94 = por %p92, %p93
      %p95 = scmp.ne.s32.totalorder %s84, %s85
      %p96 = scmp.eq.s32.totalorder %s38, 0
      %p97 = por %p95, %p96
      %p98 = scmp.ne.s32.totalorder %s84, %s85
      %p99 = scmp.eq.s32.totalorder %s39, 3
      %p100 = por %p98, %p99
      %p102 = scmp.ne.s32.totalorder %s85, %s101
      %p103 = scmp.eq.s32.totalorder %s39, 0
      %p104 = por %p102, %p103
      %s105 = ssub.s32 %s41, %s48
      %p106 = scmp.eq.s32.totalorder %s105, 0
      %s108 = sadd.s32 %s107, 1
      %s109 = scalar_select %p106, %s107, %s108
      %p112 = pneg %p106
      %p113 = scmp.eq.s32.totalorder %s33, 3
      %p114 = por %p112, %p113
      %p115 = scmp.ne.s32.totalorder %s107, %s110
      %p116 = scmp.eq.s32.totalorder %s33, 0
      %p117 = por %p115, %p116
      %p118 = scmp.ne.s32.totalorder %s107, %s110
      %p119 = scmp.eq.s32.totalorder %s38, 3
      %p120 = por %p118, %p119
      %p121 = scmp.ne.s32.totalorder %s110, %s111
      %p122 = scmp.eq.s32.totalorder %s38, 0
      %p123 = por %p121, %p122
      %p124 = scmp.ne.s32.totalorder %s110, %s111
      %p125 = scmp.eq.s32.totalorder %s39, 3
      %p126 = por %p124, %p125
      %p128 = scmp.ne.s32.totalorder %s111, %s127
      %p129 = scmp.eq.s32.totalorder %s39, 0
      %p130 = por %p128, %p129
      %s131 = ssub.s32 %s41, %s48
      %p132 = scmp.eq.s32.totalorder %s131, 0
      %s134 = sadd.s32 %s133, 1
      %s135 = scalar_select %p132, %s133, %s134
      %p138 = pneg %p132
      %p139 = scmp.eq.s32.totalorder %s33, 3
      %p140 = por %p138, %p139
      %p141 = scmp.ne.s32.totalorder %s133, %s136
      %p142 = scmp.eq.s32.totalorder %s33, 0
      %p143 = por %p141, %p142
      %p144 = scmp.ne.s32.totalorder %s133, %s136
      %p145 = scmp.eq.s32.totalorder %s38, 3
      %p146 = por %p144, %p145
      %p147 = scmp.ne.s32.totalorder %s136, %s137
      %p148 = scmp.eq.s32.totalorder %s38, 0
      %p149 = por %p147, %p148
      %p150 = scmp.ne.s32.totalorder %s136, %s137
      %p151 = scmp.eq.s32.totalorder %s39, 3
      %p152 = por %p150, %p151
      %p154 = scmp.ne.s32.totalorder %s137, %s153
      %p155 = scmp.eq.s32.totalorder %s39, 0
      %p156 = por %p154, %p155
      %s157 = ssub.s32 %s41, %s48
      %p158 = scmp.eq.s32.totalorder %s157, 0
      %s160 = sadd.s32 %s159, 1
      %s161 = scalar_select %p158, %s159, %s160
      %p164 = pneg %p158
      %p165 = scmp.eq.s32.totalorder %s33, 3
      %p166 = por %p164, %p165
      %p167 = scmp.ne.s32.totalorder %s159, %s162
      %p168 = scmp.eq.s32.totalorder %s33, 0
      %p169 = por %p167, %p168
      %p170 = scmp.ne.s32.totalorder %s159, %s162
      %p171 = scmp.eq.s32.totalorder %s38, 3
      %p172 = por %p170, %p171
      %p173 = scmp.ne.s32.totalorder %s162, %s163
      %p174 = scmp.eq.s32.totalorder %s38, 0
      %p175 = por %p173, %p174
      %p176 = scmp.ne.s32.totalorder %s162, %s163
      %p177 = scmp.eq.s32.totalorder %s39, 3
      %p178 = por %p176, %p177
      %p180 = scmp.ne.s32.totalorder %s163, %s179
      %p181 = scmp.eq.s32.totalorder %s39, 0
      %p182 = por %p180, %p181
      %s183 = ssub.s32 %s41, %s48
      %p184 = scmp.eq.s32.totalorder %s183, 0
      %s186 = sadd.s32 %s185, 1
      %s187 = scalar_select %p184, %s185, %s186
      %p190 = pneg %p184
      %p191 = scmp.eq.s32.totalorder %s33, 3
      %p192 = por %p190, %p191
      %p193 = scmp.ne.s32.totalorder %s185, %s188
      %p194 = scmp.eq.s32.totalorder %s33, 0
      %p195 = por %p193, %p194
      %p196 = scmp.ne.s32.totalorder %s185, %s188
      %p197 = scmp.eq.s32.totalorder %s38, 3
      %p198 = por %p196, %p197
      %p199 = scmp.ne.s32.totalorder %s188, %s189
      %p200 = scmp.eq.s32.totalorder %s38, 0
      %p201 = por %p199, %p200
      %p202 = scmp.ne.s32.totalorder %s188, %s189
      %p203 = scmp.eq.s32.totalorder %s39, 3
      %p204 = por %p202, %p203
      %p206 = scmp.ne.s32.totalorder %s189, %s205
      %p207 = scmp.eq.s32.totalorder %s39, 0
      %p208 = por %p206, %p207
      %s209 = ssub.s32 %s41, %s48
      %p210 = scmp.eq.s32.totalorder %s209, 0
      %s212 = sadd.s32 %s211, 1
      %s213 = scalar_select %p210, %s211, %s212
      %p216 = pneg %p210
      %p217 = scmp.eq.s32.totalorder %s33, 3
      %p218 = por %p216, %p217
      %p219 = scmp.ne.s32.totalorder %s211, %s214
      %p220 = scmp.eq.s32.totalorder %s33, 0
      %p221 = por %p219, %p220
      %p222 = scmp.ne.s32.totalorder %s211, %s214
      %p223 = scmp.eq.s32.totalorder %s38, 3
      %p224 = por %p222, %p223
      %p225 = scmp.ne.s32.totalorder %s214, %s215
      %p226 = scmp.eq.s32.totalorder %s38, 0
      %p227 = por %p225, %p226
      %p228 = scmp.ne.s32.totalorder %s214, %s215
      %p229 = scmp.eq.s32.totalorder %s39, 3
      %p230 = por %p228, %p229
      %p232 = scmp.ne.s32.totalorder %s215, %s231
      %p233 = scmp.eq.s32.totalorder %s39, 0
      %p234 = por %p232, %p233
      %s235 = ssub.s32 %s41, %s48
      %p236 = scmp.eq.s32.totalorder %s235, 0
      %s238 = sadd.s32 %s237, 1
      %s239 = scalar_select %p236, %s237, %s238
      %p242 = pneg %p236
      %p243 = scmp.eq.s32.totalorder %s33, 3
      %p244 = por %p242, %p243
      %p245 = scmp.ne.s32.totalorder %s237, %s240
      %p246 = scmp.eq.s32.totalorder %s33, 0
      %p247 = por %p245, %p246
      %p248 = scmp.ne.s32.totalorder %s237, %s240
      %p249 = scmp.eq.s32.totalorder %s38, 3
      %p250 = por %p248, %p249
      %p251 = scmp.ne.s32.totalorder %s240, %s241
      %p252 = scmp.eq.s32.totalorder %s38, 0
      %p253 = por %p251, %p252
      %p254 = scmp.ne.s32.totalorder %s240, %s241
      %p255 = scmp.eq.s32.totalorder %s39, 3
      %p256 = por %p254, %p255
      %p258 = scmp.ne.s32.totalorder %s241, %s257
      %p259 = scmp.eq.s32.totalorder %s39, 0
      %p260 = por %p258, %p259
      %s261 = ssub.s32 %s41, %s48
      %p262 = scmp.eq.s32.totalorder %s261, 0
      %s264 = sadd.s32 %s263, 1
      %s265 = scalar_select %p262, %s263, %s264
      %p268 = pneg %p262
      %p269 = scmp.eq.s32.totalorder %s33, 3
      %p270 = por %p268, %p269
      %p271 = scmp.ne.s32.totalorder %s263, %s266
      %p272 = scmp.eq.s32.totalorder %s33, 0
      %p273 = por %p271, %p272
      %p274 = scmp.ne.s32.totalorder %s263, %s266
      %p275 = scmp.eq.s32.totalorder %s38, 3
      %p276 = por %p274, %p275
      %p277 = scmp.ne.s32.totalorder %s266, %s267
      %p278 = scmp.eq.s32.totalorder %s38, 0
      %p279 = por %p277, %p278
      %p280 = scmp.ne.s32.totalorder %s266, %s267
      %p281 = scmp.eq.s32.totalorder %s39, 3
      %p282 = por %p280, %p281
      %p284 = scmp.ne.s32.totalorder %s267, %s283
      %p285 = scmp.eq.s32.totalorder %s39, 0
      %p286 = por %p284, %p285
      %s287 = ssub.s32 %s41, %s48
      %p288 = scmp.eq.s32.totalorder %s287, 0
      %s290 = sadd.s32 %s289, 1
      %s291 = scalar_select %p288, %s289, %s290
      %p294 = pneg %p288
      %p295 = scmp.eq.s32.totalorder %s33, 3
      %p296 = por %p294, %p295
      %p297 = scmp.ne.s32.totalorder %s289, %s292
      %p298 = scmp.eq.s32.totalorder %s33, 0
      %p299 = por %p297, %p298
      %p300 = scmp.ne.s32.totalorder %s289, %s292
      %p301 = scmp.eq.s32.totalorder %s38, 3
      %p302 = por %p300, %p301
      %p303 = scmp.ne.s32.totalorder %s292, %s293
      %p304 = scmp.eq.s32.totalorder %s38, 0
      %p305 = por %p303, %p304
      %p306 = scmp.ne.s32.totalorder %s292, %s293
      %p307 = scmp.eq.s32.totalorder %s39, 3
      %p308 = por %p306, %p307
      %p310 = scmp.ne.s32.totalorder %s293, %s309
      %p311 = scmp.eq.s32.totalorder %s39, 0
      %p312 = por %p310, %p311
      %s313 = ssub.s32 %s41, %s48
      %p314 = scmp.eq.s32.totalorder %s313, 0
      %s316 = sadd.s32 %s315, 1
      %s317 = scalar_select %p314, %s315, %s316
      %p320 = pneg %p314
      %p321 = scmp.eq.s32.totalorder %s33, 3
      %p322 = por %p320, %p321
      %p323 = scmp.ne.s32.totalorder %s315, %s318
      %p324 = scmp.eq.s32.totalorder %s33, 0
      %p325 = por %p323, %p324
      %p326 = scmp.ne.s32.totalorder %s315, %s318
      %p327 = scmp.eq.s32.totalorder %s38, 3
      %p328 = por %p326, %p327
      %p329 = scmp.ne.s32.totalorder %s318, %s319
      %p330 = scmp.eq.s32.totalorder %s38, 0
      %p331 = por %p329, %p330
      %p332 = scmp.ne.s32.totalorder %s318, %s319
      %p333 = scmp.eq.s32.totalorder %s39, 3
      %p334 = por %p332, %p333
      %p336 = scmp.ne.s32.totalorder %s319, %s335
      %p337 = scmp.eq.s32.totalorder %s39, 0
      %p338 = por %p336, %p337
      %s339 = ssub.s32 %s41, %s48
      %p340 = scmp.eq.s32.totalorder %s339, 0
      %s342 = sadd.s32 %s341, 1
      %s343 = scalar_select %p340, %s341, %s342
      %p346 = pneg %p340
      %p347 = scmp.eq.s32.totalorder %s33, 3
      %p348 = por %p346, %p347
      %p349 = scmp.ne.s32.totalorder %s341, %s344
      %p350 = scmp.eq.s32.totalorder %s33, 0
      %p351 = por %p349, %p350
      %p352 = scmp.ne.s32.totalorder %s341, %s344
      %p353 = scmp.eq.s32.totalorder %s38, 3
      %p354 = por %p352, %p353
      %p355 = scmp.ne.s32.totalorder %s344, %s345
      %p356 = scmp.eq.s32.totalorder %s38, 0
      %p357 = por %p355, %p356
      %p358 = scmp.ne.s32.totalorder %s344, %s345
      %p359 = scmp.eq.s32.totalorder %s39, 3
      %p360 = por %p358, %p359
      %p362 = scmp.ne.s32.totalorder %s345, %s361
      %p363 = scmp.eq.s32.totalorder %s39, 0
      %p364 = por %p362, %p363
      %s365 = ssub.s32 %s41, %s48
      %p366 = scmp.eq.s32.totalorder %s365, 0
      %s368 = sadd.s32 %s367, 1
      %s369 = scalar_select %p366, %s367, %s368
      %p372 = pneg %p366
      %p373 = scmp.eq.s32.totalorder %s33, 3
      %p374 = por %p372, %p373
      %p375 = scmp.ne.s32.totalorder %s367, %s370
      %p376 = scmp.eq.s32.totalorder %s33, 0
      %p377 = por %p375, %p376
      %p378 = scmp.ne.s32.totalorder %s367, %s370
      %p379 = scmp.eq.s32.totalorder %s38, 3
      %p380 = por %p378, %p379
      %p381 = scmp.ne.s32.totalorder %s370, %s371
      %p382 = scmp.eq.s32.totalorder %s38, 0
      %p383 = por %p381, %p382
      %p384 = scmp.ne.s32.totalorder %s370, %s371
      %p385 = scmp.eq.s32.totalorder %s39, 3
      %p386 = por %p384, %p385
      %p388 = scmp.ne.s32.totalorder %s371, %s387
      %p389 = scmp.eq.s32.totalorder %s39, 0
      %p390 = por %p388, %p389
      %s391 = ssub.s32 %s41, %s48
      %p392 = scmp.eq.s32.totalorder %s391, 0
      %s394 = sadd.s32 %s393, 1
      %s395 = scalar_select %p392, %s393, %s394
      %p398 = pneg %p392
      %p399 = scmp.eq.s32.totalorder %s33, 3
      %p400 = por %p398, %p399
      %p401 = scmp.ne.s32.totalorder %s393, %s396
      %p402 = scmp.eq.s32.totalorder %s33, 0
      %p403 = por %p401, %p402
      %p404 = scmp.ne.s32.totalorder %s393, %s396
      %p405 = scmp.eq.s32.totalorder %s38, 3
      %p406 = por %p404, %p405
      %p407 = scmp.ne.s32.totalorder %s396, %s397
      %p408 = scmp.eq.s32.totalorder %s38, 0
      %p409 = por %p407, %p408
      %p410 = scmp.ne.s32.totalorder %s396, %s397
      %p411 = scmp.eq.s32.totalorder %s39, 3
      %p412 = por %p410, %p411
      %p414 = scmp.ne.s32.totalorder %s397, %s413
      %p415 = scmp.eq.s32.totalorder %s39, 0
      %p416 = por %p414, %p415
      %s417 = ssub.s32 %s41, %s48
      %p418 = scmp.eq.s32.totalorder %s417, 0
      %s420 = sadd.s32 %s419, 1
      %s421 = scalar_select %p418, %s419, %s420
      %p424 = pneg %p418
      %p425 = scmp.eq.s32.totalorder %s33, 3
      %p426 = por %p424, %p425
      %p427 = scmp.ne.s32.totalorder %s419, %s422
      %p428 = scmp.eq.s32.totalorder %s33, 0
      %p429 = por %p427, %p428
      %p430 = scmp.ne.s32.totalorder %s419, %s422
      %p431 = scmp.eq.s32.totalorder %s38, 3
      %p432 = por %p430, %p431
      %p433 = scmp.ne.s32.totalorder %s422, %s423
      %p434 = scmp.eq.s32.totalorder %s38, 0
      %p435 = por %p433, %p434
      %p436 = scmp.ne.s32.totalorder %s422, %s423
      %p437 = scmp.eq.s32.totalorder %s39, 3
      %p438 = por %p436, %p437
      %p440 = scmp.ne.s32.totalorder %s423, %s439
      %p441 = scmp.eq.s32.totalorder %s39, 0
      %p442 = por %p440, %p441
      %s443 = ssub.s32 %s41, %s48
      %p444 = scmp.eq.s32.totalorder %s443, 0
      %s446 = sadd.s32 %s445, 1
      %s447 = scalar_select %p444, %s445, %s446
      %p450 = pneg %p444
      %p451 = scmp.eq.s32.totalorder %s33, 3
      %p452 = por %p450, %p451
      %p453 = scmp.ne.s32.totalorder %s445, %s448
      %p454 = scmp.eq.s32.totalorder %s33, 0
      %p455 = por %p453, %p454
      %p456 = scmp.ne.s32.totalorder %s445, %s448
      %p457 = scmp.eq.s32.totalorder %s38, 3
      %p458 = por %p456, %p457
      %p459 = scmp.ne.s32.totalorder %s448, %s449
      %p460 = scmp.eq.s32.totalorder %s38, 0
      %p461 = por %p459, %p460
      %p462 = scmp.ne.s32.totalorder %s448, %s449
      %p463 = scmp.eq.s32.totalorder %s39, 3
      %p464 = por %p462, %p463
      %p466 = scmp.ne.s32.totalorder %s449, %s465
      %p467 = scmp.eq.s32.totalorder %s39, 0
      %p468 = por %p466, %p467
      %s469 = ssub.s32 %s41, %s48
      %p470 = scmp.eq.s32.totalorder %s469, 0
      %s472 = sadd.s32 %s471, 1
      %s473 = scalar_select %p470, %s471, %s472
      %p476 = pneg %p470
      %p477 = scmp.eq.s32.totalorder %s33, 3
      %p478 = por %p476, %p477
      %p479 = scmp.ne.s32.totalorder %s471, %s474
      %p480 = scmp.eq.s32.totalorder %s33, 0
      %p481 = por %p479, %p480
      %p482 = scmp.ne.s32.totalorder %s471, %s474
      %p483 = scmp.eq.s32.totalorder %s38, 3
      %p484 = por %p482, %p483
      %p485 = scmp.ne.s32.totalorder %s474, %s475
      %p486 = scmp.eq.s32.totalorder %s38, 0
      %p487 = por %p485, %p486
      %p488 = scmp.ne.s32.totalorder %s474, %s475
      %p489 = scmp.eq.s32.totalorder %s39, 3
      %p490 = por %p488, %p489
      %p492 = scmp.ne.s32.totalorder %s475, %s491
      %p493 = scmp.eq.s32.totalorder %s39, 0
      %p494 = por %p492, %p493
      %s495 = ssub.s32 %s41, %s48
      %p496 = scmp.eq.s32.totalorder %s495, 0
      %s498 = sadd.s32 %s497, 1
      %s499 = scalar_select %p496, %s497, %s498
      %p502 = pneg %p496
      %p503 = scmp.eq.s32.totalorder %s33, 3
      %p504 = por %p502, %p503
      %p505 = scmp.ne.s32.totalorder %s497, %s500
      %p506 = scmp.eq.s32.totalorder %s33, 0
      %p507 = por %p505, %p506
      %p508 = scmp.ne.s32.totalorder %s497, %s500
      %p509 = scmp.eq.s32.totalorder %s38, 3
      %p510 = por %p508, %p509
      %p511 = scmp.ne.s32.totalorder %s500, %s501
      %p512 = scmp.eq.s32.totalorder %s38, 0
      %p513 = por %p511, %p512
      %p514 = scmp.ne.s32.totalorder %s500, %s501
      %p515 = scmp.eq.s32.totalorder %s39, 3
      %p516 = por %p514, %p515
      %p518 = scmp.ne.s32.totalorder %s501, %s517
      %p519 = scmp.eq.s32.totalorder %s39, 0
      %p520 = por %p518, %p519
      %s521 = ssub.s32 %s40, %s52
      %p522 = scmp.eq.s32.totalorder %s521, 0
      %s524 = sadd.s32 %s523, 1
      %s525 = scalar_select %p522, %s523, %s524
      %p528 = pneg %p522
      %p529 = scmp.eq.s32.totalorder %s33, 3
      %p530 = por %p528, %p529
      %p531 = scmp.ne.s32.totalorder %s523, %s526
      %p532 = scmp.eq.s32.totalorder %s33, 0
      %p533 = por %p531, %p532
      %p534 = scmp.ne.s32.totalorder %s523, %s526
      %p535 = scmp.eq.s32.totalorder %s38, 3
      %p536 = por %p534, %p535
      %p537 = scmp.ne.s32.totalorder %s526, %s527
      %p538 = scmp.eq.s32.totalorder %s38, 0
      %p539 = por %p537, %p538
      %p540 = scmp.ne.s32.totalorder %s526, %s527
      %p541 = scmp.eq.s32.totalorder %s39, 3
      %p542 = por %p540, %p541
      %p544 = scmp.ne.s32.totalorder %s527, %s543
      %p545 = scmp.eq.s32.totalorder %s39, 0
      %p546 = por %p544, %p545
      %p547 = scmp.le.s32.totalorder 1, %s33
      %p548 = scmp.lt.s32.totalorder %s33, 5
      %p549 = pnand %p547, %p548
      %p550 = pneg %p549
      // Predicated region
      $region9: #{tpu_custom_call.1} parent=5 // pred_check
        _
      $region10: #{tpu_custom_call.1} parent=5 // pred_check_branch
        %552 = sbr.rel (%p549) target = $region12
      $region11: #{tpu_custom_call.1} parent=5 // pred_region
        %s553 = ssub.s32 %s33, 1
      $region12: #{tpu_custom_call.1} parent=5 // pred_fallthru
        _
      %p554 = scmp.lt.s32.totalorder %s33, 4
      // Predicated region
      $region13: #{tpu_custom_call.1} parent=5 // pred_check
        %p555 = pneg %p554
      $region14: #{tpu_custom_call.1} parent=5 // pred_check_branch
        %557 = sbr.rel (%p555) target = $region16
      $region15: #{tpu_custom_call.1} parent=5 // pred_region
        // Predicated region
        $region17: #{tpu_custom_call.1} parent=15 // pred_check
          %p558 = pneg %p65
        $region18: #{tpu_custom_call.1} parent=15 // pred_check_branch
          %560 = sbr.rel (%p558) target = $region20
        $region19: #{tpu_custom_call.1} parent=15 // pred_region
          %s561 = sand.u32 %s55, 1
          %s562 = scalar_lea.sflag [#allocation4], %s561
          %s563 = sand.u32 %s55, 1
          %s564 = smul.addr %s563, 16
          %s565 = scalar_lea.vmem [#allocation3], %s564
          %s567 = ssub.s32 256, 256
          %568 = vsyncadd %s562, %s567
          %s569 = smul.addr %s40, 2
          %s570 = smul.addr %s569, 128
          %s571 = scalar_lea.hbm %s0, %s570
          %s572 = sshll.u32 %s565, 4
          %s573 = int_to_ptr.vmem [resolvable:$true] %s572
          %578 = dma.hbm_to_vmem [thread:$0]  %s571, 256, %s573, %s562, 128, 128, 8
        $region20: #{tpu_custom_call.1} parent=15 // pred_fallthru
          _
        // Predicated region
        $region21: #{tpu_custom_call.1} parent=15 // pred_check
          %p579 = pneg %p91
        $region22: #{tpu_custom_call.1} parent=15 // pred_check_branch
          %581 = sbr.rel (%p579) target = $region24
        $region23: #{tpu_custom_call.1} parent=15 // pred_region
          %s582 = sand.u32 %s33, 1
          %s583 = scalar_lea.sflag [#allocation7], %s582
          %s584 = sand.u32 %s81, 1
          %s585 = smul.addr %s584, 16
          %s586 = scalar_lea.vmem [#allocation6], %s585
          %s588 = ssub.s32 256, 256
          %589 = vsyncadd %s583, %s588
          %s590 = smul.addr %s40, 2
          %s591 = smul.addr %s590, 128
          %s592 = scalar_lea.hbm %s1, %s591
          %s593 = sshll.u32 %s586, 4
          %s594 = int_to_ptr.vmem [resolvable:$true] %s593
          %599 = dma.hbm_to_vmem [thread:$0]  %s592, 256, %s594, %s583, 128, 128, 8
        $region24: #{tpu_custom_call.1} parent=15 // pred_fallthru
          _
        // Predicated region
        $region25: #{tpu_custom_call.1} parent=15 // pred_check
          %p600 = pneg %p117
        $region26: #{tpu_custom_call.1} parent=15 // pred_check_branch
          %602 = sbr.rel (%p600) target = $region28
        $region27: #{tpu_custom_call.1} parent=15 // pred_region
          %p603 = scmp.lt.s32.totalorder %s41, 1
          %s604 = scalar_select %p603, %s41, 1
          %s605 = scalar_lea.vmem %s2, %s604
        $region28: #{tpu_custom_call.1} parent=15 // pred_fallthru
          _
        // Predicated region
        $region29: #{tpu_custom_call.1} parent=15 // pred_check
          %p606 = pneg %p143
        $region30: #{tpu_custom_call.1} parent=15 // pred_check_branch
          %608 = sbr.rel (%p606) target = $region32
        $region31: #{tpu_custom_call.1} parent=15 // pred_region
          %s609 = sand.u32 %s33, 1
          %s610 = scalar_lea.sflag [#allocation7], %s609
          %s611 = sand.u32 %s133, 1
          %s612 = scalar_lea.vmem [#allocation8], %s611
          %s614 = ssub.s32 16, 16
          %615 = vsyncadd %s610, %s614
          %s616 = smul.addr %s41, 16
          %s617 = scalar_lea.hbm %s3, %s616
          %s619 = sshll.u32 %s612, 4
          %s620 = int_to_ptr.vmem [resolvable:$true] %s619
          %622 = dma.hbm_to_vmem [thread:$0]  %s617, 16, %s620, %s610
        $region32: #{tpu_custom_call.1} parent=15 // pred_fallthru
          _
        // Predicated region
        $region33: #{tpu_custom_call.1} parent=15 // pred_check
          %p623 = pneg %p169
        $region34: #{tpu_custom_call.1} parent=15 // pred_check_branch
          %625 = sbr.rel (%p623) target = $region36
        $region35: #{tpu_custom_call.1} parent=15 // pred_region
          %p626 = scmp.lt.s32.totalorder %s41, 1
          %s627 = scalar_select %p626, %s41, 1
          %s628 = smul.addr %s627, 4
          %s629 = smul.addr %s628, 8
          %s630 = scalar_lea.vmem %s4, %s629
        $region36: #{tpu_custom_call.1} parent=15 // pred_fallthru
          _
        // Predicated region
        $region37: #{tpu_custom_call.1} parent=15 // pred_check
          %p631 = pneg %p195
        $region38: #{tpu_custom_call.1} parent=15 // pred_check_branch
          %633 = sbr.rel (%p631) target = $region40
        $region39: #{tpu_custom_call.1} parent=15 // pred_region
          %p634 = scmp.lt.s32.totalorder %s41, 1
          %s635 = scalar_select %p634, %s41, 1
          %s636 = scalar_lea.vmem %s5, %s635
        $region40: #{tpu_custom_call.1} parent=15 // pred_fallthru
          _
        // Predicated region
        $region41: #{tpu_custom_call.1} parent=15 // pred_check
          %p637 = pneg %p221
        $region42: #{tpu_custom_call.1} parent=15 // pred_check_branch
          %639 = sbr.rel (%p637) target = $region44
        $region43: #{tpu_custom_call.1} parent=15 // pred_region
          %p640 = scmp.lt.s32.totalorder %s41, 1
          %s641 = scalar_select %p640, %s41, 1
          %s642 = smul.addr %s641, 4
          %s643 = smul.addr %s642, 8
          %s644 = scalar_lea.vmem %s6, %s643
        $region44: #{tpu_custom_call.1} parent=15 // pred_fallthru
          _
        // Predicated region
        $region45: #{tpu_custom_call.1} parent=15 // pred_check
          %p645 = pneg %p247
        $region46: #{tpu_custom_call.1} parent=15 // pred_check_branch
          %647 = sbr.rel (%p645) target = $region48
        $region47: #{tpu_custom_call.1} parent=15 // pred_region
          %p648 = scmp.lt.s32.totalorder %s41, 1
          %s649 = scalar_select %p648, %s41, 1
          %s650 = scalar_lea.vmem %s7, %s649
        $region48: #{tpu_custom_call.1} parent=15 // pred_fallthru
          _
        // Predicated region
        $region49: #{tpu_custom_call.1} parent=15 // pred_check
          %p651 = pneg %p273
        $region50: #{tpu_custom_call.1} parent=15 // pred_check_branch
          %653 = sbr.rel (%p651) target = $region52
        $region51: #{tpu_custom_call.1} parent=15 // pred_region
          %p654 = scmp.lt.s32.totalorder %s41, 1
          %s655 = scalar_select %p654, %s41, 1
          %s656 = smul.addr %s655, 4
          %s657 = smul.addr %s656, 8
          %s658 = scalar_lea.vmem %s8, %s657
        $region52: #{tpu_custom_call.1} parent=15 // pred_fallthru
          _
        // Predicated region
        $region53: #{tpu_custom_call.1} parent=15 // pred_check
          %p659 = pneg %p299
        $region54: #{tpu_custom_call.1} parent=15 // pred_check_branch
          %661 = sbr.rel (%p659) target = $region56
        $region55: #{tpu_custom_call.1} parent=15 // pred_region
          %p662 = scmp.lt.s32.totalorder %s41, 1
          %s663 = scalar_select %p662, %s41, 1
          %s664 = scalar_lea.vmem %s9, %s663
        $region56: #{tpu_custom_call.1} parent=15 // pred_fallthru
          _
        // Predicated region
        $region57: #{tpu_custom_call.1} parent=15 // pred_check
          %p665 = pneg %p325
        $region58: #{tpu_custom_call.1} parent=15 // pred_check_branch
          %667 = sbr.rel (%p665) target = $region60
        $region59: #{tpu_custom_call.1} parent=15 // pred_region
          %p668 = scmp.lt.s32.totalorder %s41, 1
          %s669 = scalar_select %p668, %s41, 1
          %s670 = smul.addr %s669, 4
          %s671 = smul.addr %s670, 8
          %s672 = scalar_lea.vmem %s10, %s671
        $region60: #{tpu_custom_call.1} parent=15 // pred_fallthru
          _
        // Predicated region
        $region61: #{tpu_custom_call.1} parent=15 // pred_check
          %p673 = pneg %p351
        $region62: #{tpu_custom_call.1} parent=15 // pred_check_branch
          %675 = sbr.rel (%p673) target = $region64
        $region63: #{tpu_custom_call.1} parent=15 // pred_region
          %p676 = scmp.lt.s32.totalorder %s41, 1
          %s677 = scalar_select %p676, %s41, 1
          %s678 = scalar_lea.vmem %s11, %s677
        $region64: #{tpu_custom_call.1} parent=15 // pred_fallthru
          _
        // Predicated region
        $region65: #{tpu_custom_call.1} parent=15 // pred_check
          %p679 = pneg %p377
        $region66: #{tpu_custom_call.1} parent=15 // pred_check_branch
          %681 = sbr.rel (%p679) target = $region68
        $region67: #{tpu_custom_call.1} parent=15 // pred_region
          %p682 = scmp.lt.s32.totalorder %s41, 1
          %s683 = scalar_select %p682, %s41, 1
          %s684 = scalar_lea.vmem %s12, %s683
        $region68: #{tpu_custom_call.1} parent=15 // pred_fallthru
          _
        // Predicated region
        $region69: #{tpu_custom_call.1} parent=15 // pred_check
          %p685 = pneg %p403
        $region70: #{tpu_custom_call.1} parent=15 // pred_check_branch
          %687 = sbr.rel (%p685) target = $region72
        $region71: #{tpu_custom_call.1} parent=15 // pred_region
          %p688 = scmp.lt.s32.totalorder %s41, 1
          %s689 = scalar_select %p688, %s41, 1
          %s690 = scalar_lea.vmem %s13, %s689
        $region72: #{tpu_custom_call.1} parent=15 // pred_fallthru
          _
        // Predicated region
        $region73: #{tpu_custom_call.1} parent=15 // pred_check
          %p691 = pneg %p429
        $region74: #{tpu_custom_call.1} parent=15 // pred_check_branch
          %693 = sbr.rel (%p691) target = $region76
        $region75: #{tpu_custom_call.1} parent=15 // pred_region
          %p694 = scmp.lt.s32.totalorder %s41, 1
          %s695 = scalar_select %p694, %s41, 1
          %s696 = smul.addr %s695, 4
          %s697 = smul.addr %s696, 8
          %s698 = scalar_lea.vmem %s14, %s697
        $region76: #{tpu_custom_call.1} parent=15 // pred_fallthru
          _
        // Predicated region
        $region77: #{tpu_custom_call.1} parent=15 // pred_check
          %p699 = pneg %p455
        $region78: #{tpu_custom_call.1} parent=15 // pred_check_branch
          %701 = sbr.rel (%p699) target = $region80
        $region79: #{tpu_custom_call.1} parent=15 // pred_region
          %p702 = scmp.lt.s32.totalorder %s41, 1
          %s703 = scalar_select %p702, %s41, 1
          %s704 = scalar_lea.vmem %s15, %s703
        $region80: #{tpu_custom_call.1} parent=15 // pred_fallthru
          _
        // Predicated region
        $region81: #{tpu_custom_call.1} parent=15 // pred_check
          %p705 = pneg %p481
        $region82: #{tpu_custom_call.1} parent=15 // pred_check_branch
          %707 = sbr.rel (%p705) target = $region84
        $region83: #{tpu_custom_call.1} parent=15 // pred_region
          %p708 = scmp.lt.s32.totalorder %s41, 1
          %s709 = scalar_select %p708, %s41, 1
          %s710 = smul.addr %s709, 16
          %s711 = smul.addr %s710, 8
          %s712 = scalar_lea.vmem %s16, %s711
        $region84: #{tpu_custom_call.1} parent=15 // pred_fallthru
          _
        // Predicated region
        $region85: #{tpu_custom_call.1} parent=15 // pred_check
          %p713 = pneg %p507
        $region86: #{tpu_custom_call.1} parent=15 // pred_check_branch
          %715 = sbr.rel (%p713) target = $region88
        $region87: #{tpu_custom_call.1} parent=15 // pred_region
          %p716 = scmp.lt.s32.totalorder %s41, 1
          %s717 = scalar_select %p716, %s41, 1
          %s718 = scalar_lea.vmem %s17, %s717
        $region88: #{tpu_custom_call.1} parent=15 // pred_fallthru
          _
      $region16: #{tpu_custom_call.1} parent=5 // pred_fallthru
        _
      %p719 = scmp.le.s32.totalorder 1, %s33
      %p720 = scmp.lt.s32.totalorder %s33, 5
      %p721 = pnand %p719, %p720
      %p722 = pneg %p721
      // Predicated region
      $region89: #{tpu_custom_call.1} parent=5 // pred_check
        _
      $region90: #{tpu_custom_call.1} parent=5 // pred_check_branch
        %724 = sbr.rel (%p721) target = $region92
      $region91: #{tpu_custom_call.1} parent=5 // pred_region
        %s725 = ssub.s32 %s33, 1
        %s726 = sand.u32 %s58, 1
        %s727 = scalar_lea.sflag [#allocation4], %s726
        %s728 = sand.u32 %s58, 1
        %s729 = smul.addr %s728, 16
        %s730 = scalar_lea.vmem [#allocation3], %s729
        // Predicated region
        $region93: #{tpu_custom_call.1} parent=91 // pred_check
          %p731 = pneg %p71
        $region94: #{tpu_custom_call.1} parent=91 // pred_check_branch
          %733 = sbr.rel (%p731) target = $region96
        $region95: #{tpu_custom_call.1} parent=91 // pred_region
          %734 = dma.done %s727, 256
        $region96: #{tpu_custom_call.1} parent=91 // pred_fallthru
          _
        %s735 = sand.u32 %s38, 1
        %s736 = scalar_lea.sflag [#allocation7], %s735
        %s737 = sand.u32 %s84, 1
        %s738 = smul.addr %s737, 16
        %s739 = scalar_lea.vmem [#allocation6], %s738
        // Predicated region
        $region97: #{tpu_custom_call.1} parent=91 // pred_check
          %p740 = pneg %p97
        $region98: #{tpu_custom_call.1} parent=91 // pred_check_branch
          %742 = sbr.rel (%p740) target = $region100
        $region99: #{tpu_custom_call.1} parent=91 // pred_region
          %743 = dma.done %s736, 256
        $region100: #{tpu_custom_call.1} parent=91 // pred_fallthru
          _
        %s744 = sand.u32 %s38, 1
        %s745 = scalar_lea.sflag [#allocation7], %s744
        %s746 = sand.u32 %s136, 1
        %s747 = scalar_lea.vmem [#allocation8], %s746
        // Predicated region
        $region101: #{tpu_custom_call.1} parent=91 // pred_check
          %p748 = pneg %p149
        $region102: #{tpu_custom_call.1} parent=91 // pred_check_branch
          %750 = sbr.rel (%p748) target = $region104
        $region103: #{tpu_custom_call.1} parent=91 // pred_region
          %751 = dma.done %s745, 16
        $region104: #{tpu_custom_call.1} parent=91 // pred_fallthru
          _
        %s752 = sand.u32 %s58, 1
        %s753 = scalar_lea.sflag [#allocation4], %s752
        %s754 = sand.u32 %s58, 1
        %s755 = smul.addr %s754, 16
        %s756 = scalar_lea.vmem [#allocation3], %s755
        %p757 = pneg %p71
        %p758 = pneg %p68
        %s759 = sand.u32 %s38, 1
        %s760 = scalar_lea.sflag [#allocation7], %s759
        %s761 = sand.u32 %s84, 1
        %s762 = smul.addr %s761, 16
        %s763 = scalar_lea.vmem [#allocation6], %s762
        %p764 = pneg %p97
        %p765 = pneg %p94
        %p766 = scmp.lt.s32.totalorder %s43, 1
        %s767 = scalar_select %p766, %s43, 1
        %s768 = scalar_lea.vmem %s2, %s767
        %p769 = pneg %p123
        %p770 = pneg %p120
        %s771 = sand.u32 %s38, 1
        %s772 = scalar_lea.sflag [#allocation7], %s771
        %s773 = sand.u32 %s136, 1
        %s774 = scalar_lea.vmem [#allocation8], %s773
        %p775 = pneg %p149
        %p776 = pneg %p146
        %p777 = scmp.lt.s32.totalorder %s43, 1
        %s778 = scalar_select %p777, %s43, 1
        %s779 = smul.addr %s778, 4
        %s780 = smul.addr %s779, 8
        %s781 = scalar_lea.vmem %s4, %s780
        %p782 = pneg %p175
        %p783 = pneg %p172
        %p784 = scmp.lt.s32.totalorder %s43, 1
        %s785 = scalar_select %p784, %s43, 1
        %s786 = scalar_lea.vmem %s5, %s785
        %p787 = pneg %p201
        %p788 = pneg %p198
        %p789 = scmp.lt.s32.totalorder %s43, 1
        %s790 = scalar_select %p789, %s43, 1
        %s791 = smul.addr %s790, 4
        %s792 = smul.addr %s791, 8
        %s793 = scalar_lea.vmem %s6, %s792
        %p794 = pneg %p227
        %p795 = pneg %p224
        %p796 = scmp.lt.s32.totalorder %s43, 1
        %s797 = scalar_select %p796, %s43, 1
        %s798 = scalar_lea.vmem %s7, %s797
        %p799 = pneg %p253
        %p800 = pneg %p250
        %p801 = scmp.lt.s32.totalorder %s43, 1
        %s802 = scalar_select %p801, %s43, 1
        %s803 = smul.addr %s802, 4
        %s804 = smul.addr %s803, 8
        %s805 = scalar_lea.vmem %s8, %s804
        %p806 = pneg %p279
        %p807 = pneg %p276
        %p808 = scmp.lt.s32.totalorder %s43, 1
        %s809 = scalar_select %p808, %s43, 1
        %s810 = scalar_lea.vmem %s9, %s809
        %p811 = pneg %p305
        %p812 = pneg %p302
        %p813 = scmp.lt.s32.totalorder %s43, 1
        %s814 = scalar_select %p813, %s43, 1
        %s815 = smul.addr %s814, 4
        %s816 = smul.addr %s815, 8
        %s817 = scalar_lea.vmem %s10, %s816
        %p818 = pneg %p331
        %p819 = pneg %p328
        %p820 = scmp.lt.s32.totalorder %s43, 1
        %s821 = scalar_select %p820, %s43, 1
        %s822 = scalar_lea.vmem %s11, %s821
        %p823 = pneg %p357
        %p824 = pneg %p354
        %p825 = scmp.lt.s32.totalorder %s43, 1
        %s826 = scalar_select %p825, %s43, 1
        %s827 = scalar_lea.vmem %s12, %s826
        %p828 = pneg %p383
        %p829 = pneg %p380
        %p830 = scmp.lt.s32.totalorder %s43, 1
        %s831 = scalar_select %p830, %s43, 1
        %s832 = scalar_lea.vmem %s13, %s831
        %p833 = pneg %p409
        %p834 = pneg %p406
        %p835 = scmp.lt.s32.totalorder %s43, 1
        %s836 = scalar_select %p835, %s43, 1
        %s837 = smul.addr %s836, 4
        %s838 = smul.addr %s837, 8
        %s839 = scalar_lea.vmem %s14, %s838
        %p840 = pneg %p435
        %p841 = pneg %p432
        %p842 = scmp.lt.s32.totalorder %s43, 1
        %s843 = scalar_select %p842, %s43, 1
        %s844 = scalar_lea.vmem %s15, %s843
        %p845 = pneg %p461
        %p846 = pneg %p458
        %p847 = scmp.lt.s32.totalorder %s43, 1
        %s848 = scalar_select %p847, %s43, 1
        %s849 = smul.addr %s848, 16
        %s850 = smul.addr %s849, 8
        %s851 = scalar_lea.vmem %s16, %s850
        %p852 = pneg %p487
        %p853 = pneg %p484
        %p854 = scmp.lt.s32.totalorder %s43, 1
        %s855 = scalar_select %p854, %s43, 1
        %s856 = scalar_lea.vmem %s17, %s855
        %p857 = pneg %p513
        %p858 = pneg %p510
        %p859 = pneg %p539
        %p860 = pneg %p536
        %s861 = sand.u32 %s526, 1
        %s862 = scalar_lea.sflag [#allocation5], %s861
        %s863 = sand.u32 %s526, 1
        %s864 = smul.addr %s863, 16
        %s865 = scalar_lea.vmem [#allocation9], %s864
        %p866 = scmp.lt.s32.totalorder %s43, 1
        %s867 = scalar_select %p866, %s43, 1
        %s868 = scalar_lea.vmem %s2, %s867
        %p869 = scmp.lt.s32.totalorder %s43, 1
        %s870 = scalar_select %p869, %s43, 1
        %s871 = smul.addr %s870, 4
        %s872 = smul.addr %s871, 8
        %s873 = scalar_lea.vmem %s4, %s872
        %p874 = scmp.lt.s32.totalorder %s43, 1
        %s875 = scalar_select %p874, %s43, 1
        %s876 = scalar_lea.vmem %s5, %s875
        %p877 = scmp.lt.s32.totalorder %s43, 1
        %s878 = scalar_select %p877, %s43, 1
        %s879 = smul.addr %s878, 4
        %s880 = smul.addr %s879, 8
        %s881 = scalar_lea.vmem %s6, %s880
        %p882 = scmp.lt.s32.totalorder %s43, 1
        %s883 = scalar_select %p882, %s43, 1
        %s884 = scalar_lea.vmem %s7, %s883
        %p885 = scmp.lt.s32.totalorder %s43, 1
        %s886 = scalar_select %p885, %s43, 1
        %s887 = smul.addr %s886, 4
        %s888 = smul.addr %s887, 8
        %s889 = scalar_lea.vmem %s8, %s888
        %p890 = scmp.lt.s32.totalorder %s43, 1
        %s891 = scalar_select %p890, %s43, 1
        %s892 = scalar_lea.vmem %s9, %s891
        %p893 = scmp.lt.s32.totalorder %s43, 1
        %s894 = scalar_select %p893, %s43, 1
        %s895 = smul.addr %s894, 4
        %s896 = smul.addr %s895, 8
        %s897 = scalar_lea.vmem %s10, %s896
        %p898 = scmp.lt.s32.totalorder %s43, 1
        %s899 = scalar_select %p898, %s43, 1
        %s900 = scalar_lea.vmem %s11, %s899
        %p901 = scmp.lt.s32.totalorder %s43, 1
        %s902 = scalar_select %p901, %s43, 1
        %s903 = scalar_lea.vmem %s12, %s902
        %p904 = scmp.lt.s32.totalorder %s43, 1
        %s905 = scalar_select %p904, %s43, 1
        %s906 = scalar_lea.vmem %s13, %s905
        %p907 = scmp.lt.s32.totalorder %s43, 1
        %s908 = scalar_select %p907, %s43, 1
        %s909 = smul.addr %s908, 4
        %s910 = smul.addr %s909, 8
        %s911 = scalar_lea.vmem %s14, %s910
        %p912 = scmp.lt.s32.totalorder %s43, 1
        %s913 = scalar_select %p912, %s43, 1
        %s914 = scalar_lea.vmem %s15, %s913
        %p915 = scmp.lt.s32.totalorder %s43, 1
        %s916 = scalar_select %p915, %s43, 1
        %s917 = smul.addr %s916, 16
        %s918 = smul.addr %s917, 8
        %s919 = scalar_lea.vmem %s16, %s918
        %p920 = scmp.lt.s32.totalorder %s43, 1
        %s921 = scalar_select %p920, %s43, 1
        %s922 = scalar_lea.vmem %s17, %s921
        %p923 = scmp.eq.s32.totalorder %s43, 0
        // Predicated region
        $region105: #{tpu_custom_call.1} parent=91 // pred_check
          %p924 = pneg %p923
        $region106: #{tpu_custom_call.1} parent=91 // pred_check_branch
          %926 = sbr.rel (%p924) target = $region108
        $region107: #{tpu_custom_call.1} parent=91 // pred_region
          %v927 = vld [vmem:[%s730] sm:$0xff]
          %v928 = vld [vmem:[%s730 + $0x8] sm:$0xff]
          %vm929 = vcmask 261120
          %930 = vst.msk [vmem:[#allocation2] sm:$0xff] %vm929, %v927
          %931 = vst.msk [vmem:[#allocation2 + $0x8] sm:$0xff] %vm929, %v928
        $region108: #{tpu_custom_call.1} parent=91 // pred_fallthru
          _
        %v932 = vld [vmem:[#allocation2] sm:$0xff]
        %v933 = vld [vmem:[#allocation2 + $0x8] sm:$0xff]
        %v934 = vld [vmem:[%s739] sm:$0xff]
        %v935 = vld [vmem:[%s739 + $0x8] sm:$0xff]
        %v936 = vld [vmem:[%s868] sm:$0x1]
        %v937 = vld [vmem:[%s747] sm:$0x1]
        %vm938 = vcmask 261120
        %v939 = vsel %vm938, %v932, 0.0
        %940 = vadd.xlane.f32.xlu0 %v939
        %v941 = vpop.xlane.xlu0 %940
        %v942 = vsel %vm938, %v933, 0.0
        %943 = vadd.xlane.f32.xlu0 %v942
        %v944 = vpop.xlane.xlu0 %943
        %v945 = vrcp.pop 32.0
        %v946 = vmul.f32 %v941, %v945
        %v947 = vmul.f32 %v944, %v945
        %v948 = vsub.f32 %v932, %v946
        %v949 = vsub.f32 %v933, %v947
        %v950 = vmul.f32 %v948, %v948
        %v951 = vmul.f32 %v949, %v949
        %v952 = vsel %vm938, %v950, 0.0
        %953 = vadd.xlane.f32.xlu0 %v952
        %v954 = vpop.xlane.xlu0 %953
        %v955 = vsel %vm938, %v951, 0.0
        %956 = vadd.xlane.f32.xlu0 %v955
        %v957 = vpop.xlane.xlu0 %956
        %v958 = vmul.f32 %v954, %v945
        %v959 = vmul.f32 %v957, %v945
        %v960 = vadd.f32 %v958, 1e-12
        %v961 = vadd.f32 %v959, 1e-12
        %v962 = vrsqrt.pop %v960
        %v963 = vrsqrt.pop %v961
        %v964 = vmul.f32 %v948, %v962
        %v965 = vmul.f32 %v949, %v963
        %v967 = vlaneseq
        %v968 = vshrl.u32 %v967, 7
        %v969 = vsub.s32 0, %v968
        %v970 = vrot.slane %v936, %v969
        %v972 = vmul.f32 %v964, %v970
        %v973 = vmul.f32 %v965, %v970
        %v975 = vlaneseq
        %v976 = vshrl.u32 %v975, 7
        %v977 = vsub.s32 0, %v976
        %v978 = vrot.slane %v937, %v977
        %v980 = vadd.f32 %v972, %v978
        %v981 = vadd.f32 %v973, %v978
        %v982 = vld [vmem:[%s873] sm:$0xff]
        %v983 = vld [vmem:[%s873 + $0x8] sm:$0xff]
        %v984 = vld [vmem:[%s873 + $0x10] sm:$0xff]
        %v985 = vld [vmem:[%s873 + $0x18] sm:$0xff]
        %v986 = vld [vmem:[%s876] sm:$0x1]
        %v988 = vlaneseq
        %v989 = vshrl.u32 %v988, 7
        %v990 = vsub.s32 0, %v989
        %v991 = vrot.slane %v986, %v990
        %v994 = vsel %vm938, %v980, 0
        %v997 = vsel %vm938, %v981, 0
        %999 = vmatprep.subr.mxu0 0.0
        %1000 = vmatpush1.msra.mxu0 0.0
        %1001 = vmatprep.subr.mxu0 0.0
        %1002 = vmatpush1.msra.mxu0 0.0
        %1003 = vmatprep.subr.mxu0 0.0
        %1004 = vmatpush1.msra.mxu0 0.0
        %1005 = vmatprep.subr.mxu0 0.0
        %1006 = vmatpush1.msra.mxu0 0.0
        %1007 = vmatprep.subr.mxu0 0.0
        %1008 = vmatpush1.msra.mxu0 0.0
        %1009 = vmatprep.subr.mxu0 0.0
        %1010 = vmatpush1.msra.mxu0 0.0
        %1011 = vmatprep.subr.mxu0 0.0
        %1012 = vmatpush1.msra.mxu0 0.0
        %1013 = vmatprep.subr.mxu0 0.0
        %1014 = vmatpush1.msra.mxu0 0.0
        %1015 = vmatprep.subr.mxu0 0.0
        %1016 = vmatpush1.msra.mxu0 0.0
        %1017 = vmatprep.subr.mxu0 0.0
        %1018 = vmatpush1.msra.mxu0 0.0
        %1019 = vmatprep.subr.mxu0 0.0
        %1020 = vmatpush1.msra.mxu0 0.0
        %1021 = vmatprep.subr.mxu0 0.0
        %1022 = vmatpush1.msra.mxu0 0.0
        %1023 = vmatprep.subr.mxu0 0.0
        %1024 = vmatpush1.msra.mxu0 %v985
        %1025 = vmatprep.subr.mxu0 0.0
        %1026 = vmatpush1.msra.mxu0 %v984
        %1027 = vmatprep.subr.mxu0 0.0
        %1028 = vmatpush1.msra.mxu0 %v983
        %1029 = vmatprep.subr.mxu0 0.0
        %1030 = vmatpush1.msra.mxu0 %v982
        %1031 = vmatprep.subr.mxu0 0.0
        %1032 = vmatpush2.msra.mxu0 0.0
        %1033 = vmatprep.subr.mxu0 0.0
        %1034 = vmatpush2.msra.mxu0 0.0
        %1035 = vmatprep.subr.mxu0 0.0
        %1036 = vmatpush2.msra.mxu0 0.0
        %1037 = vmatprep.subr.mxu0 0.0
        %1038 = vmatpush2.msra.mxu0 0.0
        %1039 = vmatprep.subr.mxu0 0.0
        %1040 = vmatpush2.msra.mxu0 0.0
        %1041 = vmatprep.subr.mxu0 0.0
        %1042 = vmatpush2.msra.mxu0 0.0
        %1043 = vmatprep.subr.mxu0 0.0
        %1044 = vmatpush2.msra.mxu0 0.0
        %1045 = vmatprep.subr.mxu0 0.0
        %1046 = vmatpush2.msra.mxu0 0.0
        %1047 = vmatprep.subr.mxu0 0.0
        %1048 = vmatpush2.msra.mxu0 0.0
        %1049 = vmatprep.subr.mxu0 0.0
        %1050 = vmatpush2.msra.mxu0 0.0
        %1051 = vmatprep.subr.mxu0 0.0
        %1052 = vmatpush2.msra.mxu0 0.0
        %1053 = vmatprep.subr.mxu0 0.0
        %1054 = vmatpush2.msra.mxu0 0.0
        %1055 = vmatprep.subr.mxu0 0.0
        %1056 = vmatpush2.msra.mxu0 0.0
        %1057 = vmatprep.subr.mxu0 0.0
        %1058 = vmatpush2.msra.mxu0 0.0
        %1059 = vmatprep.subr.mxu0 0.0
        %1060 = vmatpush2.msra.mxu0 0.0
        %1061 = vmatprep.subr.mxu0 0.0
        %1062 = vmatpush2.msra.mxu0 0.0
        %1063 = vmatprep.mubr.f32.mxu0 0.0
        %1064 = vmatmul.mubr.f32.gmra.mxu0 %v994
        %v1065 = vpop.f32.mrf.mxu0
        %v1066 = vadd.f32 %v991, %v1065
        %v1067 = vpop.f32.mrf.mxu0
        %1068 = vmatprep.mubr.f32.mxu0 0.0
        %1069 = vmatmul.mubr.f32.gmra.mxu0 %v997
        %v1070 = vpop.f32.mrf.mxu0
        %v1071 = vadd.f32 %v991, %v1070
        %v1072 = vpop.f32.mrf.mxu0
        %1073 = vdwg.mxu0
        %v1074 = vld [vmem:[%s881] sm:$0xff]
        %v1075 = vld [vmem:[%s881 + $0x8] sm:$0xff]
        %v1076 = vld [vmem:[%s881 + $0x10] sm:$0xff]
        %v1077 = vld [vmem:[%s881 + $0x18] sm:$0xff]
        %v1078 = vld [vmem:[%s884] sm:$0x1]
        %v1080 = vlaneseq
        %v1081 = vshrl.u32 %v1080, 7
        %v1082 = vsub.s32 0, %v1081
        %v1083 = vrot.slane %v1078, %v1082
        %1085 = vmatprep.subr.mxu0 0.0
        %1086 = vmatpush1.msra.mxu0 0.0
        %1087 = vmatprep.subr.mxu0 0.0
        %1088 = vmatpush1.msra.mxu0 0.0
        %1089 = vmatprep.subr.mxu0 0.0
        %1090 = vmatpush1.msra.mxu0 0.0
        %1091 = vmatprep.subr.mxu0 0.0
        %1092 = vmatpush1.msra.mxu0 0.0
        %1093 = vmatprep.subr.mxu0 0.0
        %1094 = vmatpush1.msra.mxu0 0.0
        %1095 = vmatprep.subr.mxu0 0.0
        %1096 = vmatpush1.msra.mxu0 0.0
        %1097 = vmatprep.subr.mxu0 0.0
        %1098 = vmatpush1.msra.mxu0 0.0
        %1099 = vmatprep.subr.mxu0 0.0
        %1100 = vmatpush1.msra.mxu0 0.0
        %1101 = vmatprep.subr.mxu0 0.0
        %1102 = vmatpush1.msra.mxu0 0.0
        %1103 = vmatprep.subr.mxu0 0.0
        %1104 = vmatpush1.msra.mxu0 0.0
        %1105 = vmatprep.subr.mxu0 0.0
        %1106 = vmatpush1.msra.mxu0 0.0
        %1107 = vmatprep.subr.mxu0 0.0
        %1108 = vmatpush1.msra.mxu0 0.0
        %1109 = vmatprep.subr.mxu0 0.0
        %1110 = vmatpush1.msra.mxu0 %v1077
        %1111 = vmatprep.subr.mxu0 0.0
        %1112 = vmatpush1.msra.mxu0 %v1076
        %1113 = vmatprep.subr.mxu0 0.0
        %1114 = vmatpush1.msra.mxu0 %v1075
        %1115 = vmatprep.subr.mxu0 0.0
        %1116 = vmatpush1.msra.mxu0 %v1074
        %1117 = vmatprep.subr.mxu0 0.0
        %1118 = vmatpush2.msra.mxu0 0.0
        %1119 = vmatprep.subr.mxu0 0.0
        %1120 = vmatpush2.msra.mxu0 0.0
        %1121 = vmatprep.subr.mxu0 0.0
        %1122 = vmatpush2.msra.mxu0 0.0
        %1123 = vmatprep.subr.mxu0 0.0
        %1124 = vmatpush2.msra.mxu0 0.0
        %1125 = vmatprep.subr.mxu0 0.0
        %1126 = vmatpush2.msra.mxu0 0.0
        %1127 = vmatprep.subr.mxu0 0.0
        %1128 = vmatpush2.msra.mxu0 0.0
        %1129 = vmatprep.subr.mxu0 0.0
        %1130 = vmatpush2.msra.mxu0 0.0
        %1131 = vmatprep.subr.mxu0 0.0
        %1132 = vmatpush2.msra.mxu0 0.0
        %1133 = vmatprep.subr.mxu0 0.0
        %1134 = vmatpush2.msra.mxu0 0.0
        %1135 = vmatprep.subr.mxu0 0.0
        %1136 = vmatpush2.msra.mxu0 0.0
        %1137 = vmatprep.subr.mxu0 0.0
        %1138 = vmatpush2.msra.mxu0 0.0
        %1139 = vmatprep.subr.mxu0 0.0
        %1140 = vmatpush2.msra.mxu0 0.0
        %1141 = vmatprep.subr.mxu0 0.0
        %1142 = vmatpush2.msra.mxu0 0.0
        %1143 = vmatprep.subr.mxu0 0.0
        %1144 = vmatpush2.msra.mxu0 0.0
        %1145 = vmatprep.subr.mxu0 0.0
        %1146 = vmatpush2.msra.mxu0 0.0
        %1147 = vmatprep.subr.mxu0 0.0
        %1148 = vmatpush2.msra.mxu0 0.0
        %1149 = vmatprep.mubr.f32.mxu0 0.0
        %1150 = vmatmul.mubr.f32.gmra.mxu0 %v994
        %v1151 = vpop.f32.mrf.mxu0
        %v1152 = vadd.f32 %v1083, %v1151
        %v1153 = vpop.f32.mrf.mxu0
        %1154 = vmatprep.mubr.f32.mxu0 0.0
        %1155 = vmatmul.mubr.f32.gmra.mxu0 %v997
        %v1156 = vpop.f32.mrf.mxu0
        %v1157 = vadd.f32 %v1083, %v1156
        %v1158 = vpop.f32.mrf.mxu0
        %1159 = vdwg.mxu0
        %v1160 = vld [vmem:[%s889] sm:$0xff]
        %v1161 = vld [vmem:[%s889 + $0x8] sm:$0xff]
        %v1162 = vld [vmem:[%s889 + $0x10] sm:$0xff]
        %v1163 = vld [vmem:[%s889 + $0x18] sm:$0xff]
        %v1164 = vld [vmem:[%s892] sm:$0x1]
        %v1166 = vlaneseq
        %v1167 = vshrl.u32 %v1166, 7
        %v1168 = vsub.s32 0, %v1167
        %v1169 = vrot.slane %v1164, %v1168
        %1171 = vmatprep.subr.mxu0 0.0
        %1172 = vmatpush1.msra.mxu0 0.0
        %1173 = vmatprep.subr.mxu0 0.0
        %1174 = vmatpush1.msra.mxu0 0.0
        %1175 = vmatprep.subr.mxu0 0.0
        %1176 = vmatpush1.msra.mxu0 0.0
        %1177 = vmatprep.subr.mxu0 0.0
        %1178 = vmatpush1.msra.mxu0 0.0
        %1179 = vmatprep.subr.mxu0 0.0
        %1180 = vmatpush1.msra.mxu0 0.0
        %1181 = vmatprep.subr.mxu0 0.0
        %1182 = vmatpush1.msra.mxu0 0.0
        %1183 = vmatprep.subr.mxu0 0.0
        %1184 = vmatpush1.msra.mxu0 0.0
        %1185 = vmatprep.subr.mxu0 0.0
        %1186 = vmatpush1.msra.mxu0 0.0
        %1187 = vmatprep.subr.mxu0 0.0
        %1188 = vmatpush1.msra.mxu0 0.0
        %1189 = vmatprep.subr.mxu0 0.0
        %1190 = vmatpush1.msra.mxu0 0.0
        %1191 = vmatprep.subr.mxu0 0.0
        %1192 = vmatpush1.msra.mxu0 0.0
        %1193 = vmatprep.subr.mxu0 0.0
        %1194 = vmatpush1.msra.mxu0 0.0
        %1195 = vmatprep.subr.mxu0 0.0
        %1196 = vmatpush1.msra.mxu0 %v1163
        %1197 = vmatprep.subr.mxu0 0.0
        %1198 = vmatpush1.msra.mxu0 %v1162
        %1199 = vmatprep.subr.mxu0 0.0
        %1200 = vmatpush1.msra.mxu0 %v1161
        %1201 = vmatprep.subr.mxu0 0.0
        %1202 = vmatpush1.msra.mxu0 %v1160
        %1203 = vmatprep.subr.mxu0 0.0
        %1204 = vmatpush2.msra.mxu0 0.0
        %1205 = vmatprep.subr.mxu0 0.0
        %1206 = vmatpush2.msra.mxu0 0.0
        %1207 = vmatprep.subr.mxu0 0.0
        %1208 = vmatpush2.msra.mxu0 0.0
        %1209 = vmatprep.subr.mxu0 0.0
        %1210 = vmatpush2.msra.mxu0 0.0
        %1211 = vmatprep.subr.mxu0 0.0
        %1212 = vmatpush2.msra.mxu0 0.0
        %1213 = vmatprep.subr.mxu0 0.0
        %1214 = vmatpush2.msra.mxu0 0.0
        %1215 = vmatprep.subr.mxu0 0.0
        %1216 = vmatpush2.msra.mxu0 0.0
        %1217 = vmatprep.subr.mxu0 0.0
        %1218 = vmatpush2.msra.mxu0 0.0
        %1219 = vmatprep.subr.mxu0 0.0
        %1220 = vmatpush2.msra.mxu0 0.0
        %1221 = vmatprep.subr.mxu0 0.0
        %1222 = vmatpush2.msra.mxu0 0.0
        %1223 = vmatprep.subr.mxu0 0.0
        %1224 = vmatpush2.msra.mxu0 0.0
        %1225 = vmatprep.subr.mxu0 0.0
        %1226 = vmatpush2.msra.mxu0 0.0
        %1227 = vmatprep.subr.mxu0 0.0
        %1228 = vmatpush2.msra.mxu0 0.0
        %1229 = vmatprep.subr.mxu0 0.0
        %1230 = vmatpush2.msra.mxu0 0.0
        %1231 = vmatprep.subr.mxu0 0.0
        %1232 = vmatpush2.msra.mxu0 0.0
        %1233 = vmatprep.subr.mxu0 0.0
        %1234 = vmatpush2.msra.mxu0 0.0
        %1235 = vmatprep.mubr.f32.mxu0 0.0
        %1236 = vmatmul.mubr.f32.gmra.mxu0 %v994
        %v1237 = vpop.f32.mrf.mxu0
        %v1238 = vadd.f32 %v1169, %v1237
        %v1239 = vpop.f32.mrf.mxu0
        %1240 = vmatprep.mubr.f32.mxu0 0.0
        %1241 = vmatmul.mubr.f32.gmra.mxu0 %v997
        %v1242 = vpop.f32.mrf.mxu0
        %v1243 = vadd.f32 %v1169, %v1242
        %v1244 = vpop.f32.mrf.mxu0
        %1245 = vdwg.mxu0
        %vm1246 = vcmask 64512
        %v1248 = vsel %vm1246, %v1066, 0
        %v1251 = vsel %vm1246, %v1071, 0
        %v1254 = vsel %vm1246, %v1152, 0
        %v1257 = vsel %vm1246, %v1157, 0
        %1259 = vmatprep.subr.mxu0 0.0
        %1260 = vmatpush1.xpose.msra.mxu0 0.0
        %1261 = vmatprep.subr.mxu0 0.0
        %1262 = vmatpush1.xpose.msra.mxu0 0.0
        %1263 = vmatprep.subr.mxu0 0.0
        %1264 = vmatpush1.xpose.msra.mxu0 0.0
        %1265 = vmatprep.subr.mxu0 0.0
        %1266 = vmatpush1.xpose.msra.mxu0 0.0
        %1267 = vmatprep.subr.mxu0 0.0
        %1268 = vmatpush1.xpose.msra.mxu0 0.0
        %1269 = vmatprep.subr.mxu0 0.0
        %1270 = vmatpush1.xpose.msra.mxu0 0.0
        %1271 = vmatprep.subr.mxu0 0.0
        %1272 = vmatpush1.xpose.msra.mxu0 0.0
        %1273 = vmatprep.subr.mxu0 0.0
        %1274 = vmatpush1.xpose.msra.mxu0 0.0
        %1275 = vmatprep.subr.mxu0 0.0
        %1276 = vmatpush1.xpose.msra.mxu0 0.0
        %1277 = vmatprep.subr.mxu0 0.0
        %1278 = vmatpush1.xpose.msra.mxu0 0.0
        %1279 = vmatprep.subr.mxu0 0.0
        %1280 = vmatpush1.xpose.msra.mxu0 0.0
        %1281 = vmatprep.subr.mxu0 0.0
        %1282 = vmatpush1.xpose.msra.mxu0 0.0
        %1283 = vmatprep.subr.mxu0 0.0
        %1284 = vmatpush1.xpose.msra.mxu0 0.0
        %1285 = vmatprep.subr.mxu0 0.0
        %1286 = vmatpush1.xpose.msra.mxu0 0.0
        %1287 = vmatprep.subr.mxu0 0.0
        %1288 = vmatpush1.xpose.msra.mxu0 %v1257
        %1289 = vmatprep.subr.mxu0 0.0
        %1290 = vmatpush1.xpose.msra.mxu0 %v1254
        %1291 = vmatprep.subr.mxu0 0.0
        %1292 = vmatpush2.xpose.msra.mxu0 0.0
        %1293 = vmatprep.subr.mxu0 0.0
        %1294 = vmatpush2.xpose.msra.mxu0 0.0
        %1295 = vmatprep.subr.mxu0 0.0
        %1296 = vmatpush2.xpose.msra.mxu0 0.0
        %1297 = vmatprep.subr.mxu0 0.0
        %1298 = vmatpush2.xpose.msra.mxu0 0.0
        %1299 = vmatprep.subr.mxu0 0.0
        %1300 = vmatpush2.xpose.msra.mxu0 0.0
        %1301 = vmatprep.subr.mxu0 0.0
        %1302 = vmatpush2.xpose.msra.mxu0 0.0
        %1303 = vmatprep.subr.mxu0 0.0
        %1304 = vmatpush2.xpose.msra.mxu0 0.0
        %1305 = vmatprep.subr.mxu0 0.0
        %1306 = vmatpush2.xpose.msra.mxu0 0.0
        %1307 = vmatprep.subr.mxu0 0.0
        %1308 = vmatpush2.xpose.msra.mxu0 0.0
        %1309 = vmatprep.subr.mxu0 0.0
        %1310 = vmatpush2.xpose.msra.mxu0 0.0
        %1311 = vmatprep.subr.mxu0 0.0
        %1312 = vmatpush2.xpose.msra.mxu0 0.0
        %1313 = vmatprep.subr.mxu0 0.0
        %1314 = vmatpush2.xpose.msra.mxu0 0.0
        %1315 = vmatprep.subr.mxu0 0.0
        %1316 = vmatpush2.xpose.msra.mxu0 0.0
        %1317 = vmatprep.subr.mxu0 0.0
        %1318 = vmatpush2.xpose.msra.mxu0 0.0
        %1319 = vmatprep.subr.mxu0 0.0
        %1320 = vmatpush2.xpose.msra.mxu0 0.0
        %1321 = vmatprep.subr.mxu0 0.0
        %1322 = vmatpush2.xpose.msra.mxu0 0.0
        %1323 = vmatprep.mubr.f32.mxu0 0.0
        %1324 = vmatmul.mubr.f32.gmra.mxu0 %v1248
        %v1325 = vpop.f32.mrf.mxu0
        %v1326 = vadd.f32 0.0, %v1325
        %v1327 = vpop.f32.mrf.mxu0
        %1328 = vmatprep.mubr.f32.mxu0 0.0
        %1329 = vmatmul.mubr.f32.gmra.mxu0 %v1251
        %v1330 = vpop.f32.mrf.mxu0
        %v1331 = vadd.f32 0.0, %v1330
        %v1332 = vpop.f32.mrf.mxu0
        %1333 = vdwg.mxu0
        %v1334 = vmul.f32 %v1326, 0.35355338
        %v1335 = vmul.f32 %v1331, 0.35355338
        %vm1336 = vcmp.eq.f32.partialorder %v934, 0.0
        %vm1337 = vcmp.eq.f32.partialorder %v935, 0.0
        %v1338 = vsel %vm1336, -1e+09, %v1334
        %v1339 = vsel %vm1337, -1e+09, %v1335
        %vm1340 = vcmask 130048
        %v1341 = vsel %vm1340, %v1338, -inf
        %1342 = vmax.xlane.f32.xlu0 %v1341
        %v1343 = vpop.xlane.xlu0 %1342
        %v1344 = vsel %vm1340, %v1339, -inf
        %1345 = vmax.xlane.f32.xlu0 %v1344
        %v1346 = vpop.xlane.xlu0 %1345
        %v1347 = vsub.f32 %v1338, %v1343
        %v1348 = vsub.f32 %v1339, %v1346
        %v1349 = vmul.f32 %v1347, 1.442695
        %v1350 = vpow.pop %v1349
        %v1351 = vmul.f32 %v1348, 1.442695
        %v1352 = vpow.pop %v1351
        %v1353 = vsel %vm1340, %v1350, 0.0
        %1354 = vadd.xlane.f32.xlu0 %v1353
        %v1355 = vpop.xlane.xlu0 %1354
        %v1356 = vsel %vm1340, %v1352, 0.0
        %1357 = vadd.xlane.f32.xlu0 %v1356
        %v1358 = vpop.xlane.xlu0 %1357
        %v1359 = vrcp.pop %v1355
        %v1360 = vmul.f32 %v1350, %v1359
        %v1361 = vrcp.pop %v1358
        %v1362 = vmul.f32 %v1352, %v1361
        %v1364 = vsel %vm1340, %v1360, 0
        %v1367 = vsel %vm1340, %v1362, 0
        %1369 = vmatprep.subr.mxu0 0.0
        %1370 = vmatpush1.msra.mxu0 0.0
        %1371 = vmatprep.subr.mxu0 0.0
        %1372 = vmatpush1.msra.mxu0 0.0
        %1373 = vmatprep.subr.mxu0 0.0
        %1374 = vmatpush1.msra.mxu0 0.0
        %1375 = vmatprep.subr.mxu0 0.0
        %1376 = vmatpush1.msra.mxu0 0.0
        %1377 = vmatprep.subr.mxu0 0.0
        %1378 = vmatpush1.msra.mxu0 0.0
        %1379 = vmatprep.subr.mxu0 0.0
        %1380 = vmatpush1.msra.mxu0 0.0
        %1381 = vmatprep.subr.mxu0 0.0
        %1382 = vmatpush1.msra.mxu0 0.0
        %1383 = vmatprep.subr.mxu0 0.0
        %1384 = vmatpush1.msra.mxu0 0.0
        %1385 = vmatprep.subr.mxu0 0.0
        %1386 = vmatpush1.msra.mxu0 0.0
        %1387 = vmatprep.subr.mxu0 0.0
        %1388 = vmatpush1.msra.mxu0 0.0
        %1389 = vmatprep.subr.mxu0 0.0
        %1390 = vmatpush1.msra.mxu0 0.0
        %1391 = vmatprep.subr.mxu0 0.0
        %1392 = vmatpush1.msra.mxu0 0.0
        %1393 = vmatprep.subr.mxu0 0.0
        %1394 = vmatpush1.msra.mxu0 0.0
        %1395 = vmatprep.subr.mxu0 0.0
        %1396 = vmatpush1.msra.mxu0 0.0
        %1397 = vmatprep.subr.mxu0 0.0
        %1398 = vmatpush1.msra.mxu0 %v1243
        %1399 = vmatprep.subr.mxu0 0.0
        %1400 = vmatpush1.msra.mxu0 %v1238
        %1401 = vmatprep.subr.mxu0 0.0
        %1402 = vmatpush2.msra.mxu0 0.0
        %1403 = vmatprep.subr.mxu0 0.0
        %1404 = vmatpush2.msra.mxu0 0.0
        %1405 = vmatprep.subr.mxu0 0.0
        %1406 = vmatpush2.msra.mxu0 0.0
        %1407 = vmatprep.subr.mxu0 0.0
        %1408 = vmatpush2.msra.mxu0 0.0
        %1409 = vmatprep.subr.mxu0 0.0
        %1410 = vmatpush2.msra.mxu0 0.0
        %1411 = vmatprep.subr.mxu0 0.0
        %1412 = vmatpush2.msra.mxu0 0.0
        %1413 = vmatprep.subr.mxu0 0.0
        %1414 = vmatpush2.msra.mxu0 0.0
        %1415 = vmatprep.subr.mxu0 0.0
        %1416 = vmatpush2.msra.mxu0 0.0
        %1417 = vmatprep.subr.mxu0 0.0
        %1418 = vmatpush2.msra.mxu0 0.0
        %1419 = vmatprep.subr.mxu0 0.0
        %1420 = vmatpush2.msra.mxu0 0.0
        %1421 = vmatprep.subr.mxu0 0.0
        %1422 = vmatpush2.msra.mxu0 0.0
        %1423 = vmatprep.subr.mxu0 0.0
        %1424 = vmatpush2.msra.mxu0 0.0
        %1425 = vmatprep.subr.mxu0 0.0
        %1426 = vmatpush2.msra.mxu0 0.0
        %1427 = vmatprep.subr.mxu0 0.0
        %1428 = vmatpush2.msra.mxu0 0.0
        %1429 = vmatprep.subr.mxu0 0.0
        %1430 = vmatpush2.msra.mxu0 0.0
        %1431 = vmatprep.subr.mxu0 0.0
        %1432 = vmatpush2.msra.mxu0 0.0
        %1433 = vmatprep.mubr.f32.mxu0 0.0
        %1434 = vmatmul.mubr.f32.gmra.mxu0 %v1364
        %v1435 = vpop.f32.mrf.mxu0
        %v1436 = vadd.f32 0.0, %v1435
        %v1437 = vpop.f32.mrf.mxu0
        %1438 = vmatprep.mubr.f32.mxu0 0.0
        %1439 = vmatmul.mubr.f32.gmra.mxu0 %v1367
        %v1440 = vpop.f32.mrf.mxu0
        %v1441 = vadd.f32 0.0, %v1440
        %v1442 = vpop.f32.mrf.mxu0
        %1443 = vdwg.mxu0
        %1444 = vrot.lane.b32.xlu0 %v1066, 120
        %v1445 = vpop.permute.xlu0 %1444
        %1446 = vrot.lane.b32.xlu0 %v1071, 120
        %v1447 = vpop.permute.xlu0 %1446
        %1448 = vrot.lane.b32.xlu0 %v1152, 120
        %v1449 = vpop.permute.xlu0 %1448
        %1450 = vrot.lane.b32.xlu0 %v1157, 120
        %v1451 = vpop.permute.xlu0 %1450
        %v1452 = vsel %vm1246, %v1445, 0
        %v1454 = vsel %vm1246, %v1447, 0
        %v1456 = vsel %vm1246, %v1449, 0
        %v1458 = vsel %vm1246, %v1451, 0
        %1460 = vmatprep.subr.mxu0 0.0
        %1461 = vmatpush1.xpose.msra.mxu0 0.0
        %1462 = vmatprep.subr.mxu0 0.0
        %1463 = vmatpush1.xpose.msra.mxu0 0.0
        %1464 = vmatprep.subr.mxu0 0.0
        %1465 = vmatpush1.xpose.msra.mxu0 0.0
        %1466 = vmatprep.subr.mxu0 0.0
        %1467 = vmatpush1.xpose.msra.mxu0 0.0
        %1468 = vmatprep.subr.mxu0 0.0
        %1469 = vmatpush1.xpose.msra.mxu0 0.0
        %1470 = vmatprep.subr.mxu0 0.0
        %1471 = vmatpush1.xpose.msra.mxu0 0.0
        %1472 = vmatprep.subr.mxu0 0.0
        %1473 = vmatpush1.xpose.msra.mxu0 0.0
        %1474 = vmatprep.subr.mxu0 0.0
        %1475 = vmatpush1.xpose.msra.mxu0 0.0
        %1476 = vmatprep.subr.mxu0 0.0
        %1477 = vmatpush1.xpose.msra.mxu0 0.0
        %1478 = vmatprep.subr.mxu0 0.0
        %1479 = vmatpush1.xpose.msra.mxu0 0.0
        %1480 = vmatprep.subr.mxu0 0.0
        %1481 = vmatpush1.xpose.msra.mxu0 0.0
        %1482 = vmatprep.subr.mxu0 0.0
        %1483 = vmatpush1.xpose.msra.mxu0 0.0
        %1484 = vmatprep.subr.mxu0 0.0
        %1485 = vmatpush1.xpose.msra.mxu0 0.0
        %1486 = vmatprep.subr.mxu0 0.0
        %1487 = vmatpush1.xpose.msra.mxu0 0.0
        %1488 = vmatprep.subr.mxu0 0.0
        %1489 = vmatpush1.xpose.msra.mxu0 %v1458
        %1490 = vmatprep.subr.mxu0 0.0
        %1491 = vmatpush1.xpose.msra.mxu0 %v1456
        %1492 = vmatprep.subr.mxu0 0.0
        %1493 = vmatpush2.xpose.msra.mxu0 0.0
        %1494 = vmatprep.subr.mxu0 0.0
        %1495 = vmatpush2.xpose.msra.mxu0 0.0
        %1496 = vmatprep.subr.mxu0 0.0
        %1497 = vmatpush2.xpose.msra.mxu0 0.0
        %1498 = vmatprep.subr.mxu0 0.0
        %1499 = vmatpush2.xpose.msra.mxu0 0.0
        %1500 = vmatprep.subr.mxu0 0.0
        %1501 = vmatpush2.xpose.msra.mxu0 0.0
        %1502 = vmatprep.subr.mxu0 0.0
        %1503 = vmatpush2.xpose.msra.mxu0 0.0
        %1504 = vmatprep.subr.mxu0 0.0
        %1505 = vmatpush2.xpose.msra.mxu0 0.0
        %1506 = vmatprep.subr.mxu0 0.0
        %1507 = vmatpush2.xpose.msra.mxu0 0.0
        %1508 = vmatprep.subr.mxu0 0.0
        %1509 = vmatpush2.xpose.msra.mxu0 0.0
        %1510 = vmatprep.subr.mxu0 0.0
        %1511 = vmatpush2.xpose.msra.mxu0 0.0
        %1512 = vmatprep.subr.mxu0 0.0
        %1513 = vmatpush2.xpose.msra.mxu0 0.0
        %1514 = vmatprep.subr.mxu0 0.0
        %1515 = vmatpush2.xpose.msra.mxu0 0.0
        %1516 = vmatprep.subr.mxu0 0.0
        %1517 = vmatpush2.xpose.msra.mxu0 0.0
        %1518 = vmatprep.subr.mxu0 0.0
        %1519 = vmatpush2.xpose.msra.mxu0 0.0
        %1520 = vmatprep.subr.mxu0 0.0
        %1521 = vmatpush2.xpose.msra.mxu0 0.0
        %1522 = vmatprep.subr.mxu0 0.0
        %1523 = vmatpush2.xpose.msra.mxu0 0.0
        %1524 = vmatprep.mubr.f32.mxu0 0.0
        %1525 = vmatmul.mubr.f32.gmra.mxu0 %v1452
        %v1526 = vpop.f32.mrf.mxu0
        %v1527 = vadd.f32 0.0, %v1526
        %v1528 = vpop.f32.mrf.mxu0
        %1529 = vmatprep.mubr.f32.mxu0 0.0
        %1530 = vmatmul.mubr.f32.gmra.mxu0 %v1454
        %v1531 = vpop.f32.mrf.mxu0
        %v1532 = vadd.f32 0.0, %v1531
        %v1533 = vpop.f32.mrf.mxu0
        %1534 = vdwg.mxu0
        %v1535 = vmul.f32 %v1527, 0.35355338
        %v1536 = vmul.f32 %v1532, 0.35355338
        %v1537 = vsel %vm1336, -1e+09, %v1535
        %v1538 = vsel %vm1337, -1e+09, %v1536
        %v1539 = vsel %vm1340, %v1537, -inf
        %1540 = vmax.xlane.f32.xlu0 %v1539
        %v1541 = vpop.xlane.xlu0 %1540
        %v1542 = vsel %vm1340, %v1538, -inf
        %1543 = vmax.xlane.f32.xlu0 %v1542
        %v1544 = vpop.xlane.xlu0 %1543
        %v1545 = vsub.f32 %v1537, %v1541
        %v1546 = vsub.f32 %v1538, %v1544
        %v1547 = vmul.f32 %v1545, 1.442695
        %v1548 = vpow.pop %v1547
        %v1549 = vmul.f32 %v1546, 1.442695
        %v1550 = vpow.pop %v1549
        %v1551 = vsel %vm1340, %v1548, 0.0
        %1552 = vadd.xlane.f32.xlu0 %v1551
        %v1553 = vpop.xlane.xlu0 %1552
        %v1554 = vsel %vm1340, %v1550, 0.0
        %1555 = vadd.xlane.f32.xlu0 %v1554
        %v1556 = vpop.xlane.xlu0 %1555
        %v1557 = vrcp.pop %v1553
        %v1558 = vmul.f32 %v1548, %v1557
        %v1559 = vrcp.pop %v1556
        %v1560 = vmul.f32 %v1550, %v1559
        %1563 = vrot.lane.b32.xlu0 %v1238, 120
        %v1564 = vpop.permute.xlu0 %1563
        %1565 = vrot.lane.b32.xlu0 %v1243, 120
        %v1566 = vpop.permute.xlu0 %1565
        %v1570 = vsel %vm1340, %v1558, 0
        %v1573 = vsel %vm1340, %v1560, 0
        %1575 = vmatprep.subr.mxu0 0.0
        %1576 = vmatpush1.msra.mxu0 0.0
        %1577 = vmatprep.subr.mxu0 0.0
        %1578 = vmatpush1.msra.mxu0 0.0
        %1579 = vmatprep.subr.mxu0 0.0
        %1580 = vmatpush1.msra.mxu0 0.0
        %1581 = vmatprep.subr.mxu0 0.0
        %1582 = vmatpush1.msra.mxu0 0.0
        %1583 = vmatprep.subr.mxu0 0.0
        %1584 = vmatpush1.msra.mxu0 0.0
        %1585 = vmatprep.subr.mxu0 0.0
        %1586 = vmatpush1.msra.mxu0 0.0
        %1587 = vmatprep.subr.mxu0 0.0
        %1588 = vmatpush1.msra.mxu0 0.0
        %1589 = vmatprep.subr.mxu0 0.0
        %1590 = vmatpush1.msra.mxu0 0.0
        %1591 = vmatprep.subr.mxu0 0.0
        %1592 = vmatpush1.msra.mxu0 0.0
        %1593 = vmatprep.subr.mxu0 0.0
        %1594 = vmatpush1.msra.mxu0 0.0
        %1595 = vmatprep.subr.mxu0 0.0
        %1596 = vmatpush1.msra.mxu0 0.0
        %1597 = vmatprep.subr.mxu0 0.0
        %1598 = vmatpush1.msra.mxu0 0.0
        %1599 = vmatprep.subr.mxu0 0.0
        %1600 = vmatpush1.msra.mxu0 0.0
        %1601 = vmatprep.subr.mxu0 0.0
        %1602 = vmatpush1.msra.mxu0 0.0
        %1603 = vmatprep.subr.mxu0 0.0
        %1604 = vmatpush1.msra.mxu0 %v1566
        %1605 = vmatprep.subr.mxu0 0.0
        %1606 = vmatpush1.msra.mxu0 %v1564
        %1607 = vmatprep.subr.mxu0 0.0
        %1608 = vmatpush2.msra.mxu0 0.0
        %1609 = vmatprep.subr.mxu0 0.0
        %1610 = vmatpush2.msra.mxu0 0.0
        %1611 = vmatprep.subr.mxu0 0.0
        %1612 = vmatpush2.msra.mxu0 0.0
        %1613 = vmatprep.subr.mxu0 0.0
        %1614 = vmatpush2.msra.mxu0 0.0
        %1615 = vmatprep.subr.mxu0 0.0
        %1616 = vmatpush2.msra.mxu0 0.0
        %1617 = vmatprep.subr.mxu0 0.0
        %1618 = vmatpush2.msra.mxu0 0.0
        %1619 = vmatprep.subr.mxu0 0.0
        %1620 = vmatpush2.msra.mxu0 0.0
        %1621 = vmatprep.subr.mxu0 0.0
        %1622 = vmatpush2.msra.mxu0 0.0
        %1623 = vmatprep.subr.mxu0 0.0
        %1624 = vmatpush2.msra.mxu0 0.0
        %1625 = vmatprep.subr.mxu0 0.0
        %1626 = vmatpush2.msra.mxu0 0.0
        %1627 = vmatprep.subr.mxu0 0.0
        %1628 = vmatpush2.msra.mxu0 0.0
        %1629 = vmatprep.subr.mxu0 0.0
        %1630 = vmatpush2.msra.mxu0 0.0
        %1631 = vmatprep.subr.mxu0 0.0
        %1632 = vmatpush2.msra.mxu0 0.0
        %1633 = vmatprep.subr.mxu0 0.0
        %1634 = vmatpush2.msra.mxu0 0.0
        %1635 = vmatprep.subr.mxu0 0.0
        %1636 = vmatpush2.msra.mxu0 0.0
        %1637 = vmatprep.subr.mxu0 0.0
        %1638 = vmatpush2.msra.mxu0 0.0
        %1639 = vmatprep.mubr.f32.mxu0 0.0
        %1640 = vmatmul.mubr.f32.gmra.mxu0 %v1570
        %v1641 = vpop.f32.mrf.mxu0
        %v1642 = vadd.f32 0.0, %v1641
        %v1643 = vpop.f32.mrf.mxu0
        %1644 = vmatprep.mubr.f32.mxu0 0.0
        %1645 = vmatmul.mubr.f32.gmra.mxu0 %v1573
        %v1646 = vpop.f32.mrf.mxu0
        %v1647 = vadd.f32 0.0, %v1646
        %v1648 = vpop.f32.mrf.mxu0
        %1649 = vdwg.mxu0
        %1650 = vrot.lane.b32.xlu0 %v1066, 112
        %v1651 = vpop.permute.xlu0 %1650
        %1652 = vrot.lane.b32.xlu0 %v1071, 112
        %v1653 = vpop.permute.xlu0 %1652
        %1654 = vrot.lane.b32.xlu0 %v1152, 112
        %v1655 = vpop.permute.xlu0 %1654
        %1656 = vrot.lane.b32.xlu0 %v1157, 112
        %v1657 = vpop.permute.xlu0 %1656
        %v1658 = vsel %vm1246, %v1651, 0
        %v1660 = vsel %vm1246, %v1653, 0
        %v1662 = vsel %vm1246, %v1655, 0
        %v1664 = vsel %vm1246, %v1657, 0
        %1666 = vmatprep.subr.mxu0 0.0
        %1667 = vmatpush1.xpose.msra.mxu0 0.0
        %1668 = vmatprep.subr.mxu0 0.0
        %1669 = vmatpush1.xpose.msra.mxu0 0.0
        %1670 = vmatprep.subr.mxu0 0.0
        %1671 = vmatpush1.xpose.msra.mxu0 0.0
        %1672 = vmatprep.subr.mxu0 0.0
        %1673 = vmatpush1.xpose.msra.mxu0 0.0
        %1674 = vmatprep.subr.mxu0 0.0
        %1675 = vmatpush1.xpose.msra.mxu0 0.0
        %1676 = vmatprep.subr.mxu0 0.0
        %1677 = vmatpush1.xpose.msra.mxu0 0.0
        %1678 = vmatprep.subr.mxu0 0.0
        %1679 = vmatpush1.xpose.msra.mxu0 0.0
        %1680 = vmatprep.subr.mxu0 0.0
        %1681 = vmatpush1.xpose.msra.mxu0 0.0
        %1682 = vmatprep.subr.mxu0 0.0
        %1683 = vmatpush1.xpose.msra.mxu0 0.0
        %1684 = vmatprep.subr.mxu0 0.0
        %1685 = vmatpush1.xpose.msra.mxu0 0.0
        %1686 = vmatprep.subr.mxu0 0.0
        %1687 = vmatpush1.xpose.msra.mxu0 0.0
        %1688 = vmatprep.subr.mxu0 0.0
        %1689 = vmatpush1.xpose.msra.mxu0 0.0
        %1690 = vmatprep.subr.mxu0 0.0
        %1691 = vmatpush1.xpose.msra.mxu0 0.0
        %1692 = vmatprep.subr.mxu0 0.0
        %1693 = vmatpush1.xpose.msra.mxu0 0.0
        %1694 = vmatprep.subr.mxu0 0.0
        %1695 = vmatpush1.xpose.msra.mxu0 %v1664
        %1696 = vmatprep.subr.mxu0 0.0
        %1697 = vmatpush1.xpose.msra.mxu0 %v1662
        %1698 = vmatprep.subr.mxu0 0.0
        %1699 = vmatpush2.xpose.msra.mxu0 0.0
        %1700 = vmatprep.subr.mxu0 0.0
        %1701 = vmatpush2.xpose.msra.mxu0 0.0
        %1702 = vmatprep.subr.mxu0 0.0
        %1703 = vmatpush2.xpose.msra.mxu0 0.0
        %1704 = vmatprep.subr.mxu0 0.0
        %1705 = vmatpush2.xpose.msra.mxu0 0.0
        %1706 = vmatprep.subr.mxu0 0.0
        %1707 = vmatpush2.xpose.msra.mxu0 0.0
        %1708 = vmatprep.subr.mxu0 0.0
        %1709 = vmatpush2.xpose.msra.mxu0 0.0
        %1710 = vmatprep.subr.mxu0 0.0
        %1711 = vmatpush2.xpose.msra.mxu0 0.0
        %1712 = vmatprep.subr.mxu0 0.0
        %1713 = vmatpush2.xpose.msra.mxu0 0.0
        %1714 = vmatprep.subr.mxu0 0.0
        %1715 = vmatpush2.xpose.msra.mxu0 0.0
        %1716 = vmatprep.subr.mxu0 0.0
        %1717 = vmatpush2.xpose.msra.mxu0 0.0
        %1718 = vmatprep.subr.mxu0 0.0
        %1719 = vmatpush2.xpose.msra.mxu0 0.0
        %1720 = vmatprep.subr.mxu0 0.0
        %1721 = vmatpush2.xpose.msra.mxu0 0.0
        %1722 = vmatprep.subr.mxu0 0.0
        %1723 = vmatpush2.xpose.msra.mxu0 0.0
        %1724 = vmatprep.subr.mxu0 0.0
        %1725 = vmatpush2.xpose.msra.mxu0 0.0
        %1726 = vmatprep.subr.mxu0 0.0
        %1727 = vmatpush2.xpose.msra.mxu0 0.0
        %1728 = vmatprep.subr.mxu0 0.0
        %1729 = vmatpush2.xpose.msra.mxu0 0.0
        %1730 = vmatprep.mubr.f32.mxu0 0.0
        %1731 = vmatmul.mubr.f32.gmra.mxu0 %v1658
        %v1732 = vpop.f32.mrf.mxu0
        %v1733 = vadd.f32 0.0, %v1732
        %v1734 = vpop.f32.mrf.mxu0
        %1735 = vmatprep.mubr.f32.mxu0 0.0
        %1736 = vmatmul.mubr.f32.gmra.mxu0 %v1660
        %v1737 = vpop.f32.mrf.mxu0
        %v1738 = vadd.f32 0.0, %v1737
        %v1739 = vpop.f32.mrf.mxu0
        %1740 = vdwg.mxu0
        %v1741 = vmul.f32 %v1733, 0.35355338
        %v1742 = vmul.f32 %v1738, 0.35355338
        %v1743 = vsel %vm1336, -1e+09, %v1741
        %v1744 = vsel %vm1337, -1e+09, %v1742
        %v1745 = vsel %vm1340, %v1743, -inf
        %1746 = vmax.xlane.f32.xlu0 %v1745
        %v1747 = vpop.xlane.xlu0 %1746
        %v1748 = vsel %vm1340, %v1744, -inf
        %1749 = vmax.xlane.f32.xlu0 %v1748
        %v1750 = vpop.xlane.xlu0 %1749
        %v1751 = vsub.f32 %v1743, %v1747
        %v1752 = vsub.f32 %v1744, %v1750
        %v1753 = vmul.f32 %v1751, 1.442695
        %v1754 = vpow.pop %v1753
        %v1755 = vmul.f32 %v1752, 1.442695
        %v1756 = vpow.pop %v1755
        %v1757 = vsel %vm1340, %v1754, 0.0
        %1758 = vadd.xlane.f32.xlu0 %v1757
        %v1759 = vpop.xlane.xlu0 %1758
        %v1760 = vsel %vm1340, %v1756, 0.0
        %1761 = vadd.xlane.f32.xlu0 %v1760
        %v1762 = vpop.xlane.xlu0 %1761
        %v1763 = vrcp.pop %v1759
        %v1764 = vmul.f32 %v1754, %v1763
        %v1765 = vrcp.pop %v1762
        %v1766 = vmul.f32 %v1756, %v1765
        %1767 = vrot.lane.b32.xlu0 %v1238, 112
        %v1768 = vpop.permute.xlu0 %1767
        %1769 = vrot.lane.b32.xlu0 %v1243, 112
        %v1770 = vpop.permute.xlu0 %1769
        %v1774 = vsel %vm1340, %v1764, 0
        %v1777 = vsel %vm1340, %v1766, 0
        %1779 = vmatprep.subr.mxu0 0.0
        %1780 = vmatpush1.msra.mxu0 0.0
        %1781 = vmatprep.subr.mxu0 0.0
        %1782 = vmatpush1.msra.mxu0 0.0
        %1783 = vmatprep.subr.mxu0 0.0
        %1784 = vmatpush1.msra.mxu0 0.0
        %1785 = vmatprep.subr.mxu0 0.0
        %1786 = vmatpush1.msra.mxu0 0.0
        %1787 = vmatprep.subr.mxu0 0.0
        %1788 = vmatpush1.msra.mxu0 0.0
        %1789 = vmatprep.subr.mxu0 0.0
        %1790 = vmatpush1.msra.mxu0 0.0
        %1791 = vmatprep.subr.mxu0 0.0
        %1792 = vmatpush1.msra.mxu0 0.0
        %1793 = vmatprep.subr.mxu0 0.0
        %1794 = vmatpush1.msra.mxu0 0.0
        %1795 = vmatprep.subr.mxu0 0.0
        %1796 = vmatpush1.msra.mxu0 0.0
        %1797 = vmatprep.subr.mxu0 0.0
        %1798 = vmatpush1.msra.mxu0 0.0
        %1799 = vmatprep.subr.mxu0 0.0
        %1800 = vmatpush1.msra.mxu0 0.0
        %1801 = vmatprep.subr.mxu0 0.0
        %1802 = vmatpush1.msra.mxu0 0.0
        %1803 = vmatprep.subr.mxu0 0.0
        %1804 = vmatpush1.msra.mxu0 0.0
        %1805 = vmatprep.subr.mxu0 0.0
        %1806 = vmatpush1.msra.mxu0 0.0
        %1807 = vmatprep.subr.mxu0 0.0
        %1808 = vmatpush1.msra.mxu0 %v1770
        %1809 = vmatprep.subr.mxu0 0.0
        %1810 = vmatpush1.msra.mxu0 %v1768
        %1811 = vmatprep.subr.mxu0 0.0
        %1812 = vmatpush2.msra.mxu0 0.0
        %1813 = vmatprep.subr.mxu0 0.0
        %1814 = vmatpush2.msra.mxu0 0.0
        %1815 = vmatprep.subr.mxu0 0.0
        %1816 = vmatpush2.msra.mxu0 0.0
        %1817 = vmatprep.subr.mxu0 0.0
        %1818 = vmatpush2.msra.mxu0 0.0
        %1819 = vmatprep.subr.mxu0 0.0
        %1820 = vmatpush2.msra.mxu0 0.0
        %1821 = vmatprep.subr.mxu0 0.0
        %1822 = vmatpush2.msra.mxu0 0.0
        %1823 = vmatprep.subr.mxu0 0.0
        %1824 = vmatpush2.msra.mxu0 0.0
        %1825 = vmatprep.subr.mxu0 0.0
        %1826 = vmatpush2.msra.mxu0 0.0
        %1827 = vmatprep.subr.mxu0 0.0
        %1828 = vmatpush2.msra.mxu0 0.0
        %1829 = vmatprep.subr.mxu0 0.0
        %1830 = vmatpush2.msra.mxu0 0.0
        %1831 = vmatprep.subr.mxu0 0.0
        %1832 = vmatpush2.msra.mxu0 0.0
        %1833 = vmatprep.subr.mxu0 0.0
        %1834 = vmatpush2.msra.mxu0 0.0
        %1835 = vmatprep.subr.mxu0 0.0
        %1836 = vmatpush2.msra.mxu0 0.0
        %1837 = vmatprep.subr.mxu0 0.0
        %1838 = vmatpush2.msra.mxu0 0.0
        %1839 = vmatprep.subr.mxu0 0.0
        %1840 = vmatpush2.msra.mxu0 0.0
        %1841 = vmatprep.subr.mxu0 0.0
        %1842 = vmatpush2.msra.mxu0 0.0
        %1843 = vmatprep.mubr.f32.mxu0 0.0
        %1844 = vmatmul.mubr.f32.gmra.mxu0 %v1774
        %v1845 = vpop.f32.mrf.mxu0
        %v1846 = vadd.f32 0.0, %v1845
        %v1847 = vpop.f32.mrf.mxu0
        %1848 = vmatprep.mubr.f32.mxu0 0.0
        %1849 = vmatmul.mubr.f32.gmra.mxu0 %v1777
        %v1850 = vpop.f32.mrf.mxu0
        %v1851 = vadd.f32 0.0, %v1850
        %v1852 = vpop.f32.mrf.mxu0
        %1853 = vdwg.mxu0
        %1854 = vrot.lane.b32.xlu0 %v1066, 104
        %v1855 = vpop.permute.xlu0 %1854
        %1856 = vrot.lane.b32.xlu0 %v1071, 104
        %v1857 = vpop.permute.xlu0 %1856
        %1858 = vrot.lane.b32.xlu0 %v1152, 104
        %v1859 = vpop.permute.xlu0 %1858
        %1860 = vrot.lane.b32.xlu0 %v1157, 104
        %v1861 = vpop.permute.xlu0 %1860
        %v1862 = vsel %vm1246, %v1855, 0
        %v1864 = vsel %vm1246, %v1857, 0
        %v1866 = vsel %vm1246, %v1859, 0
        %v1868 = vsel %vm1246, %v1861, 0
        %1870 = vmatprep.subr.mxu0 0.0
        %1871 = vmatpush1.xpose.msra.mxu0 0.0
        %1872 = vmatprep.subr.mxu0 0.0
        %1873 = vmatpush1.xpose.msra.mxu0 0.0
        %1874 = vmatprep.subr.mxu0 0.0
        %1875 = vmatpush1.xpose.msra.mxu0 0.0
        %1876 = vmatprep.subr.mxu0 0.0
        %1877 = vmatpush1.xpose.msra.mxu0 0.0
        %1878 = vmatprep.subr.mxu0 0.0
        %1879 = vmatpush1.xpose.msra.mxu0 0.0
        %1880 = vmatprep.subr.mxu0 0.0
        %1881 = vmatpush1.xpose.msra.mxu0 0.0
        %1882 = vmatprep.subr.mxu0 0.0
        %1883 = vmatpush1.xpose.msra.mxu0 0.0
        %1884 = vmatprep.subr.mxu0 0.0
        %1885 = vmatpush1.xpose.msra.mxu0 0.0
        %1886 = vmatprep.subr.mxu0 0.0
        %1887 = vmatpush1.xpose.msra.mxu0 0.0
        %1888 = vmatprep.subr.mxu0 0.0
        %1889 = vmatpush1.xpose.msra.mxu0 0.0
        %1890 = vmatprep.subr.mxu0 0.0
        %1891 = vmatpush1.xpose.msra.mxu0 0.0
        %1892 = vmatprep.subr.mxu0 0.0
        %1893 = vmatpush1.xpose.msra.mxu0 0.0
        %1894 = vmatprep.subr.mxu0 0.0
        %1895 = vmatpush1.xpose.msra.mxu0 0.0
        %1896 = vmatprep.subr.mxu0 0.0
        %1897 = vmatpush1.xpose.msra.mxu0 0.0
        %1898 = vmatprep.subr.mxu0 0.0
        %1899 = vmatpush1.xpose.msra.mxu0 %v1868
        %1900 = vmatprep.subr.mxu0 0.0
        %1901 = vmatpush1.xpose.msra.mxu0 %v1866
        %1902 = vmatprep.subr.mxu0 0.0
        %1903 = vmatpush2.xpose.msra.mxu0 0.0
        %1904 = vmatprep.subr.mxu0 0.0
        %1905 = vmatpush2.xpose.msra.mxu0 0.0
        %1906 = vmatprep.subr.mxu0 0.0
        %1907 = vmatpush2.xpose.msra.mxu0 0.0
        %1908 = vmatprep.subr.mxu0 0.0
        %1909 = vmatpush2.xpose.msra.mxu0 0.0
        %1910 = vmatprep.subr.mxu0 0.0
        %1911 = vmatpush2.xpose.msra.mxu0 0.0
        %1912 = vmatprep.subr.mxu0 0.0
        %1913 = vmatpush2.xpose.msra.mxu0 0.0
        %1914 = vmatprep.subr.mxu0 0.0
        %1915 = vmatpush2.xpose.msra.mxu0 0.0
        %1916 = vmatprep.subr.mxu0 0.0
        %1917 = vmatpush2.xpose.msra.mxu0 0.0
        %1918 = vmatprep.subr.mxu0 0.0
        %1919 = vmatpush2.xpose.msra.mxu0 0.0
        %1920 = vmatprep.subr.mxu0 0.0
        %1921 = vmatpush2.xpose.msra.mxu0 0.0
        %1922 = vmatprep.subr.mxu0 0.0
        %1923 = vmatpush2.xpose.msra.mxu0 0.0
        %1924 = vmatprep.subr.mxu0 0.0
        %1925 = vmatpush2.xpose.msra.mxu0 0.0
        %1926 = vmatprep.subr.mxu0 0.0
        %1927 = vmatpush2.xpose.msra.mxu0 0.0
        %1928 = vmatprep.subr.mxu0 0.0
        %1929 = vmatpush2.xpose.msra.mxu0 0.0
        %1930 = vmatprep.subr.mxu0 0.0
        %1931 = vmatpush2.xpose.msra.mxu0 0.0
        %1932 = vmatprep.subr.mxu0 0.0
        %1933 = vmatpush2.xpose.msra.mxu0 0.0
        %1934 = vmatprep.mubr.f32.mxu0 0.0
        %1935 = vmatmul.mubr.f32.gmra.mxu0 %v1862
        %v1936 = vpop.f32.mrf.mxu0
        %v1937 = vadd.f32 0.0, %v1936
        %v1938 = vpop.f32.mrf.mxu0
        %1939 = vmatprep.mubr.f32.mxu0 0.0
        %1940 = vmatmul.mubr.f32.gmra.mxu0 %v1864
        %v1941 = vpop.f32.mrf.mxu0
        %v1942 = vadd.f32 0.0, %v1941
        %v1943 = vpop.f32.mrf.mxu0
        %1944 = vdwg.mxu0
        %v1945 = vmul.f32 %v1937, 0.35355338
        %v1946 = vmul.f32 %v1942, 0.35355338
        %v1947 = vsel %vm1336, -1e+09, %v1945
        %v1948 = vsel %vm1337, -1e+09, %v1946
        %v1949 = vsel %vm1340, %v1947, -inf
        %1950 = vmax.xlane.f32.xlu0 %v1949
        %v1951 = vpop.xlane.xlu0 %1950
        %v1952 = vsel %vm1340, %v1948, -inf
        %1953 = vmax.xlane.f32.xlu0 %v1952
        %v1954 = vpop.xlane.xlu0 %1953
        %v1955 = vsub.f32 %v1947, %v1951
        %v1956 = vsub.f32 %v1948, %v1954
        %v1957 = vmul.f32 %v1955, 1.442695
        %v1958 = vpow.pop %v1957
        %v1959 = vmul.f32 %v1956, 1.442695
        %v1960 = vpow.pop %v1959
        %v1961 = vsel %vm1340, %v1958, 0.0
        %1962 = vadd.xlane.f32.xlu0 %v1961
        %v1963 = vpop.xlane.xlu0 %1962
        %v1964 = vsel %vm1340, %v1960, 0.0
        %1965 = vadd.xlane.f32.xlu0 %v1964
        %v1966 = vpop.xlane.xlu0 %1965
        %v1967 = vrcp.pop %v1963
        %v1968 = vmul.f32 %v1958, %v1967
        %v1969 = vrcp.pop %v1966
        %v1970 = vmul.f32 %v1960, %v1969
        %1971 = vrot.lane.b32.xlu0 %v1238, 104
        %v1972 = vpop.permute.xlu0 %1971
        %1973 = vrot.lane.b32.xlu0 %v1243, 104
        %v1974 = vpop.permute.xlu0 %1973
        %v1978 = vsel %vm1340, %v1968, 0
        %v1981 = vsel %vm1340, %v1970, 0
        %1983 = vmatprep.subr.mxu0 0.0
        %1984 = vmatpush1.msra.mxu0 0.0
        %1985 = vmatprep.subr.mxu0 0.0
        %1986 = vmatpush1.msra.mxu0 0.0
        %1987 = vmatprep.subr.mxu0 0.0
        %1988 = vmatpush1.msra.mxu0 0.0
        %1989 = vmatprep.subr.mxu0 0.0
        %1990 = vmatpush1.msra.mxu0 0.0
        %1991 = vmatprep.subr.mxu0 0.0
        %1992 = vmatpush1.msra.mxu0 0.0
        %1993 = vmatprep.subr.mxu0 0.0
        %1994 = vmatpush1.msra.mxu0 0.0
        %1995 = vmatprep.subr.mxu0 0.0
        %1996 = vmatpush1.msra.mxu0 0.0
        %1997 = vmatprep.subr.mxu0 0.0
        %1998 = vmatpush1.msra.mxu0 0.0
        %1999 = vmatprep.subr.mxu0 0.0
        %2000 = vmatpush1.msra.mxu0 0.0
        %2001 = vmatprep.subr.mxu0 0.0
        %2002 = vmatpush1.msra.mxu0 0.0
        %2003 = vmatprep.subr.mxu0 0.0
        %2004 = vmatpush1.msra.mxu0 0.0
        %2005 = vmatprep.subr.mxu0 0.0
        %2006 = vmatpush1.msra.mxu0 0.0
        %2007 = vmatprep.subr.mxu0 0.0
        %2008 = vmatpush1.msra.mxu0 0.0
        %2009 = vmatprep.subr.mxu0 0.0
        %2010 = vmatpush1.msra.mxu0 0.0
        %2011 = vmatprep.subr.mxu0 0.0
        %2012 = vmatpush1.msra.mxu0 %v1974
        %2013 = vmatprep.subr.mxu0 0.0
        %2014 = vmatpush1.msra.mxu0 %v1972
        %2015 = vmatprep.subr.mxu0 0.0
        %2016 = vmatpush2.msra.mxu0 0.0
        %2017 = vmatprep.subr.mxu0 0.0
        %2018 = vmatpush2.msra.mxu0 0.0
        %2019 = vmatprep.subr.mxu0 0.0
        %2020 = vmatpush2.msra.mxu0 0.0
        %2021 = vmatprep.subr.mxu0 0.0
        %2022 = vmatpush2.msra.mxu0 0.0
        %2023 = vmatprep.subr.mxu0 0.0
        %2024 = vmatpush2.msra.mxu0 0.0
        %2025 = vmatprep.subr.mxu0 0.0
        %2026 = vmatpush2.msra.mxu0 0.0
        %2027 = vmatprep.subr.mxu0 0.0
        %2028 = vmatpush2.msra.mxu0 0.0
        %2029 = vmatprep.subr.mxu0 0.0
        %2030 = vmatpush2.msra.mxu0 0.0
        %2031 = vmatprep.subr.mxu0 0.0
        %2032 = vmatpush2.msra.mxu0 0.0
        %2033 = vmatprep.subr.mxu0 0.0
        %2034 = vmatpush2.msra.mxu0 0.0
        %2035 = vmatprep.subr.mxu0 0.0
        %2036 = vmatpush2.msra.mxu0 0.0
        %2037 = vmatprep.subr.mxu0 0.0
        %2038 = vmatpush2.msra.mxu0 0.0
        %2039 = vmatprep.subr.mxu0 0.0
        %2040 = vmatpush2.msra.mxu0 0.0
        %2041 = vmatprep.subr.mxu0 0.0
        %2042 = vmatpush2.msra.mxu0 0.0
        %2043 = vmatprep.subr.mxu0 0.0
        %2044 = vmatpush2.msra.mxu0 0.0
        %2045 = vmatprep.subr.mxu0 0.0
        %2046 = vmatpush2.msra.mxu0 0.0
        %2047 = vmatprep.mubr.f32.mxu0 0.0
        %2048 = vmatmul.mubr.f32.gmra.mxu0 %v1978
        %v2049 = vpop.f32.mrf.mxu0
        %v2050 = vadd.f32 0.0, %v2049
        %v2051 = vpop.f32.mrf.mxu0
        %2052 = vmatprep.mubr.f32.mxu0 0.0
        %2053 = vmatmul.mubr.f32.gmra.mxu0 %v1981
        %v2054 = vpop.f32.mrf.mxu0
        %v2055 = vadd.f32 0.0, %v2054
        %v2056 = vpop.f32.mrf.mxu0
        %2057 = vdwg.mxu0
        %2060 = vrot.lane.b32.xlu0 %v1642, 8
        %v2061 = vpop.permute.xlu0 %2060
        %2062 = vrot.lane.b32.xlu0 %v1647, 8
        %v2063 = vpop.permute.xlu0 %2062
        %2068 = vrot.lane.b32.xlu0 %v1846, 16
        %v2069 = vpop.permute.xlu0 %2068
        %2070 = vrot.lane.b32.xlu0 %v1851, 16
        %v2071 = vpop.permute.xlu0 %2070
        %2076 = vrot.lane.b32.xlu0 %v2050, 24
        %v2077 = vpop.permute.xlu0 %2076
        %2078 = vrot.lane.b32.xlu0 %v2055, 24
        %v2079 = vpop.permute.xlu0 %2078
        %v2082 = vsel %vm1246, %v1436, %v2061
        %v2083 = vsel %vm1246, %v1441, %v2063
        %v2084 = vsel %vm1340, %v2082, %v2069
        %v2085 = vsel %vm1340, %v2083, %v2071
        %vm2086 = vcmask 195584
        %v2087 = vsel %vm2086, %v2084, %v2077
        %v2088 = vsel %vm2086, %v2085, %v2079
        %v2089 = vld [vmem:[%s897] sm:$0xff]
        %v2090 = vld [vmem:[%s897 + $0x8] sm:$0xff]
        %v2091 = vld [vmem:[%s897 + $0x10] sm:$0xff]
        %v2092 = vld [vmem:[%s897 + $0x18] sm:$0xff]
        %v2093 = vld [vmem:[%s900] sm:$0x1]
        %v2095 = vlaneseq
        %v2096 = vshrl.u32 %v2095, 7
        %v2097 = vsub.s32 0, %v2096
        %v2098 = vrot.slane %v2093, %v2097
        %v2101 = vsel %vm938, %v2087, 0
        %v2104 = vsel %vm938, %v2088, 0
        %2106 = vmatprep.subr.mxu0 0.0
        %2107 = vmatpush1.msra.mxu0 0.0
        %2108 = vmatprep.subr.mxu0 0.0
        %2109 = vmatpush1.msra.mxu0 0.0
        %2110 = vmatprep.subr.mxu0 0.0
        %2111 = vmatpush1.msra.mxu0 0.0
        %2112 = vmatprep.subr.mxu0 0.0
        %2113 = vmatpush1.msra.mxu0 0.0
        %2114 = vmatprep.subr.mxu0 0.0
        %2115 = vmatpush1.msra.mxu0 0.0
        %2116 = vmatprep.subr.mxu0 0.0
        %2117 = vmatpush1.msra.mxu0 0.0
        %2118 = vmatprep.subr.mxu0 0.0
        %2119 = vmatpush1.msra.mxu0 0.0
        %2120 = vmatprep.subr.mxu0 0.0
        %2121 = vmatpush1.msra.mxu0 0.0
        %2122 = vmatprep.subr.mxu0 0.0
        %2123 = vmatpush1.msra.mxu0 0.0
        %2124 = vmatprep.subr.mxu0 0.0
        %2125 = vmatpush1.msra.mxu0 0.0
        %2126 = vmatprep.subr.mxu0 0.0
        %2127 = vmatpush1.msra.mxu0 0.0
        %2128 = vmatprep.subr.mxu0 0.0
        %2129 = vmatpush1.msra.mxu0 0.0
        %2130 = vmatprep.subr.mxu0 0.0
        %2131 = vmatpush1.msra.mxu0 %v2092
        %2132 = vmatprep.subr.mxu0 0.0
        %2133 = vmatpush1.msra.mxu0 %v2091
        %2134 = vmatprep.subr.mxu0 0.0
        %2135 = vmatpush1.msra.mxu0 %v2090
        %2136 = vmatprep.subr.mxu0 0.0
        %2137 = vmatpush1.msra.mxu0 %v2089
        %2138 = vmatprep.subr.mxu0 0.0
        %2139 = vmatpush2.msra.mxu0 0.0
        %2140 = vmatprep.subr.mxu0 0.0
        %2141 = vmatpush2.msra.mxu0 0.0
        %2142 = vmatprep.subr.mxu0 0.0
        %2143 = vmatpush2.msra.mxu0 0.0
        %2144 = vmatprep.subr.mxu0 0.0
        %2145 = vmatpush2.msra.mxu0 0.0
        %2146 = vmatprep.subr.mxu0 0.0
        %2147 = vmatpush2.msra.mxu0 0.0
        %2148 = vmatprep.subr.mxu0 0.0
        %2149 = vmatpush2.msra.mxu0 0.0
        %2150 = vmatprep.subr.mxu0 0.0
        %2151 = vmatpush2.msra.mxu0 0.0
        %2152 = vmatprep.subr.mxu0 0.0
        %2153 = vmatpush2.msra.mxu0 0.0
        %2154 = vmatprep.subr.mxu0 0.0
        %2155 = vmatpush2.msra.mxu0 0.0
        %2156 = vmatprep.subr.mxu0 0.0
        %2157 = vmatpush2.msra.mxu0 0.0
        %2158 = vmatprep.subr.mxu0 0.0
        %2159 = vmatpush2.msra.mxu0 0.0
        %2160 = vmatprep.subr.mxu0 0.0
        %2161 = vmatpush2.msra.mxu0 0.0
        %2162 = vmatprep.subr.mxu0 0.0
        %2163 = vmatpush2.msra.mxu0 0.0
        %2164 = vmatprep.subr.mxu0 0.0
        %2165 = vmatpush2.msra.mxu0 0.0
        %2166 = vmatprep.subr.mxu0 0.0
        %2167 = vmatpush2.msra.mxu0 0.0
        %2168 = vmatprep.subr.mxu0 0.0
        %2169 = vmatpush2.msra.mxu0 0.0
        %2170 = vmatprep.mubr.f32.mxu0 0.0
        %2171 = vmatmul.mubr.f32.gmra.mxu0 %v2101
        %v2172 = vpop.f32.mrf.mxu0
        %v2173 = vadd.f32 %v2098, %v2172
        %v2174 = vpop.f32.mrf.mxu0
        %2175 = vmatprep.mubr.f32.mxu0 0.0
        %2176 = vmatmul.mubr.f32.gmra.mxu0 %v2104
        %v2177 = vpop.f32.mrf.mxu0
        %v2178 = vadd.f32 %v2098, %v2177
        %v2179 = vpop.f32.mrf.mxu0
        %2180 = vdwg.mxu0
        %v2181 = vadd.f32 %v980, %v2173
        %v2182 = vadd.f32 %v981, %v2178
        %v2183 = vld [vmem:[%s903] sm:$0x1]
        %v2184 = vld [vmem:[%s906] sm:$0x1]
        %v2185 = vsel %vm938, %v2181, 0.0
        %2186 = vadd.xlane.f32.xlu0 %v2185
        %v2187 = vpop.xlane.xlu0 %2186
        %v2188 = vsel %vm938, %v2182, 0.0
        %2189 = vadd.xlane.f32.xlu0 %v2188
        %v2190 = vpop.xlane.xlu0 %2189
        %v2191 = vmul.f32 %v2187, %v945
        %v2192 = vmul.f32 %v2190, %v945
        %v2193 = vsub.f32 %v2181, %v2191
        %v2194 = vsub.f32 %v2182, %v2192
        %v2195 = vmul.f32 %v2193, %v2193
        %v2196 = vmul.f32 %v2194, %v2194
        %v2197 = vsel %vm938, %v2195, 0.0
        %2198 = vadd.xlane.f32.xlu0 %v2197
        %v2199 = vpop.xlane.xlu0 %2198
        %v2200 = vsel %vm938, %v2196, 0.0
        %2201 = vadd.xlane.f32.xlu0 %v2200
        %v2202 = vpop.xlane.xlu0 %2201
        %v2203 = vmul.f32 %v2199, %v945
        %v2204 = vmul.f32 %v2202, %v945
        %v2205 = vadd.f32 %v2203, 1e-12
        %v2206 = vadd.f32 %v2204, 1e-12
        %v2207 = vrsqrt.pop %v2205
        %v2208 = vrsqrt.pop %v2206
        %v2209 = vmul.f32 %v2193, %v2207
        %v2210 = vmul.f32 %v2194, %v2208
        %v2212 = vlaneseq
        %v2213 = vshrl.u32 %v2212, 7
        %v2214 = vsub.s32 0, %v2213
        %v2215 = vrot.slane %v2183, %v2214
        %v2217 = vmul.f32 %v2209, %v2215
        %v2218 = vmul.f32 %v2210, %v2215
        %v2220 = vlaneseq
        %v2221 = vshrl.u32 %v2220, 7
        %v2222 = vsub.s32 0, %v2221
        %v2223 = vrot.slane %v2184, %v2222
        %v2225 = vadd.f32 %v2217, %v2223
        %v2226 = vadd.f32 %v2218, %v2223
        %v2227 = vld [vmem:[%s911] sm:$0xff]
        %v2228 = vld [vmem:[%s911 + $0x8] sm:$0xff]
        %v2229 = vld [vmem:[%s911 + $0x10] sm:$0xff]
        %v2230 = vld [vmem:[%s911 + $0x18] sm:$0xff]
        %v2231 = vld [vmem:[%s914] sm:$0x1]
        %v2233 = vlaneseq
        %v2234 = vshrl.u32 %v2233, 7
        %v2235 = vsub.s32 0, %v2234
        %v2236 = vrot.slane %v2231, %v2235
        %v2239 = vsel %vm938, %v2225, 0
        %v2242 = vsel %vm938, %v2226, 0
        %2244 = vmatprep.subr.mxu0 0.0
        %2245 = vmatpush1.msra.mxu0 0.0
        %2246 = vmatprep.subr.mxu0 0.0
        %2247 = vmatpush1.msra.mxu0 0.0
        %2248 = vmatprep.subr.mxu0 0.0
        %2249 = vmatpush1.msra.mxu0 0.0
        %2250 = vmatprep.subr.mxu0 0.0
        %2251 = vmatpush1.msra.mxu0 0.0
        %2252 = vmatprep.subr.mxu0 0.0
        %2253 = vmatpush1.msra.mxu0 0.0
        %2254 = vmatprep.subr.mxu0 0.0
        %2255 = vmatpush1.msra.mxu0 0.0
        %2256 = vmatprep.subr.mxu0 0.0
        %2257 = vmatpush1.msra.mxu0 0.0
        %2258 = vmatprep.subr.mxu0 0.0
        %2259 = vmatpush1.msra.mxu0 0.0
        %2260 = vmatprep.subr.mxu0 0.0
        %2261 = vmatpush1.msra.mxu0 0.0
        %2262 = vmatprep.subr.mxu0 0.0
        %2263 = vmatpush1.msra.mxu0 0.0
        %2264 = vmatprep.subr.mxu0 0.0
        %2265 = vmatpush1.msra.mxu0 0.0
        %2266 = vmatprep.subr.mxu0 0.0
        %2267 = vmatpush1.msra.mxu0 0.0
        %2268 = vmatprep.subr.mxu0 0.0
        %2269 = vmatpush1.msra.mxu0 %v2230
        %2270 = vmatprep.subr.mxu0 0.0
        %2271 = vmatpush1.msra.mxu0 %v2229
        %2272 = vmatprep.subr.mxu0 0.0
        %2273 = vmatpush1.msra.mxu0 %v2228
        %2274 = vmatprep.subr.mxu0 0.0
        %2275 = vmatpush1.msra.mxu0 %v2227
        %2276 = vmatprep.subr.mxu0 0.0
        %2277 = vmatpush2.msra.mxu0 0.0
        %2278 = vmatprep.subr.mxu0 0.0
        %2279 = vmatpush2.msra.mxu0 0.0
        %2280 = vmatprep.subr.mxu0 0.0
        %2281 = vmatpush2.msra.mxu0 0.0
        %2282 = vmatprep.subr.mxu0 0.0
        %2283 = vmatpush2.msra.mxu0 0.0
        %2284 = vmatprep.subr.mxu0 0.0
        %2285 = vmatpush2.msra.mxu0 0.0
        %2286 = vmatprep.subr.mxu0 0.0
        %2287 = vmatpush2.msra.mxu0 0.0
        %2288 = vmatprep.subr.mxu0 0.0
        %2289 = vmatpush2.msra.mxu0 0.0
        %2290 = vmatprep.subr.mxu0 0.0
        %2291 = vmatpush2.msra.mxu0 0.0
        %2292 = vmatprep.subr.mxu0 0.0
        %2293 = vmatpush2.msra.mxu0 0.0
        %2294 = vmatprep.subr.mxu0 0.0
        %2295 = vmatpush2.msra.mxu0 0.0
        %2296 = vmatprep.subr.mxu0 0.0
        %2297 = vmatpush2.msra.mxu0 0.0
        %2298 = vmatprep.subr.mxu0 0.0
        %2299 = vmatpush2.msra.mxu0 0.0
        %2300 = vmatprep.subr.mxu0 0.0
        %2301 = vmatpush2.msra.mxu0 0.0
        %2302 = vmatprep.subr.mxu0 0.0
        %2303 = vmatpush2.msra.mxu0 0.0
        %2304 = vmatprep.subr.mxu0 0.0
        %2305 = vmatpush2.msra.mxu0 0.0
        %2306 = vmatprep.subr.mxu0 0.0
        %2307 = vmatpush2.msra.mxu0 0.0
        %2308 = vmatprep.mubr.f32.mxu0 0.0
        %2309 = vmatmul.mubr.f32.gmra.mxu0 %v2239
        %v2310 = vpop.f32.mrf.mxu0
        %v2311 = vadd.f32 %v2236, %v2310
        %v2312 = vpop.f32.mrf.mxu0
        %2313 = vmatprep.mubr.f32.mxu0 0.0
        %2314 = vmatmul.mubr.f32.gmra.mxu0 %v2242
        %v2315 = vpop.f32.mrf.mxu0
        %v2316 = vadd.f32 %v2236, %v2315
        %v2317 = vpop.f32.mrf.mxu0
        %2318 = vdwg.mxu0
        %v2319 = vmax.f32 %v2311, 0.0
        %v2320 = vmax.f32 %v2316, 0.0
        %v2321 = vld [vmem:[%s919] sm:$0xff]
        %v2322 = vld [vmem:[%s919 + $0x8] sm:$0xff]
        %v2323 = vld [vmem:[%s919 + $0x10] sm:$0xff]
        %v2324 = vld [vmem:[%s919 + $0x18] sm:$0xff]
        %v2325 = vld [vmem:[%s919 + $0x20] sm:$0xff]
        %v2326 = vld [vmem:[%s919 + $0x28] sm:$0xff]
        %v2327 = vld [vmem:[%s919 + $0x30] sm:$0xff]
        %v2328 = vld [vmem:[%s919 + $0x38] sm:$0xff]
        %v2329 = vld [vmem:[%s919 + $0x40] sm:$0xff]
        %v2330 = vld [vmem:[%s919 + $0x48] sm:$0xff]
        %v2331 = vld [vmem:[%s919 + $0x50] sm:$0xff]
        %v2332 = vld [vmem:[%s919 + $0x58] sm:$0xff]
        %v2333 = vld [vmem:[%s919 + $0x60] sm:$0xff]
        %v2334 = vld [vmem:[%s919 + $0x68] sm:$0xff]
        %v2335 = vld [vmem:[%s919 + $0x70] sm:$0xff]
        %v2336 = vld [vmem:[%s919 + $0x78] sm:$0xff]
        %v2337 = vld [vmem:[%s922] sm:$0x1]
        %v2339 = vlaneseq
        %v2340 = vshrl.u32 %v2339, 7
        %v2341 = vsub.s32 0, %v2340
        %v2342 = vrot.slane %v2337, %v2341
        %2344 = vmatprep.subr.mxu0 0.0
        %2345 = vmatpush1.msra.mxu0 %v2336
        %2346 = vmatprep.subr.mxu0 0.0
        %2347 = vmatpush1.msra.mxu0 %v2335
        %2348 = vmatprep.subr.mxu0 0.0
        %2349 = vmatpush1.msra.mxu0 %v2334
        %2350 = vmatprep.subr.mxu0 0.0
        %2351 = vmatpush1.msra.mxu0 %v2333
        %2352 = vmatprep.subr.mxu0 0.0
        %2353 = vmatpush1.msra.mxu0 %v2332
        %2354 = vmatprep.subr.mxu0 0.0
        %2355 = vmatpush1.msra.mxu0 %v2331
        %2356 = vmatprep.subr.mxu0 0.0
        %2357 = vmatpush1.msra.mxu0 %v2330
        %2358 = vmatprep.subr.mxu0 0.0
        %2359 = vmatpush1.msra.mxu0 %v2329
        %2360 = vmatprep.subr.mxu0 0.0
        %2361 = vmatpush1.msra.mxu0 %v2328
        %2362 = vmatprep.subr.mxu0 0.0
        %2363 = vmatpush1.msra.mxu0 %v2327
        %2364 = vmatprep.subr.mxu0 0.0
        %2365 = vmatpush1.msra.mxu0 %v2326
        %2366 = vmatprep.subr.mxu0 0.0
        %2367 = vmatpush1.msra.mxu0 %v2325
        %2368 = vmatprep.subr.mxu0 0.0
        %2369 = vmatpush1.msra.mxu0 %v2324
        %2370 = vmatprep.subr.mxu0 0.0
        %2371 = vmatpush1.msra.mxu0 %v2323
        %2372 = vmatprep.subr.mxu0 0.0
        %2373 = vmatpush1.msra.mxu0 %v2322
        %2374 = vmatprep.subr.mxu0 0.0
        %2375 = vmatpush1.msra.mxu0 %v2321
        %2376 = vmatprep.subr.mxu0 0.0
        %2377 = vmatpush2.msra.mxu0 0.0
        %2378 = vmatprep.subr.mxu0 0.0
        %2379 = vmatpush2.msra.mxu0 0.0
        %2380 = vmatprep.subr.mxu0 0.0
        %2381 = vmatpush2.msra.mxu0 0.0
        %2382 = vmatprep.subr.mxu0 0.0
        %2383 = vmatpush2.msra.mxu0 0.0
        %2384 = vmatprep.subr.mxu0 0.0
        %2385 = vmatpush2.msra.mxu0 0.0
        %2386 = vmatprep.subr.mxu0 0.0
        %2387 = vmatpush2.msra.mxu0 0.0
        %2388 = vmatprep.subr.mxu0 0.0
        %2389 = vmatpush2.msra.mxu0 0.0
        %2390 = vmatprep.subr.mxu0 0.0
        %2391 = vmatpush2.msra.mxu0 0.0
        %2392 = vmatprep.subr.mxu0 0.0
        %2393 = vmatpush2.msra.mxu0 0.0
        %2394 = vmatprep.subr.mxu0 0.0
        %2395 = vmatpush2.msra.mxu0 0.0
        %2396 = vmatprep.subr.mxu0 0.0
        %2397 = vmatpush2.msra.mxu0 0.0
        %2398 = vmatprep.subr.mxu0 0.0
        %2399 = vmatpush2.msra.mxu0 0.0
        %2400 = vmatprep.subr.mxu0 0.0
        %2401 = vmatpush2.msra.mxu0 0.0
        %2402 = vmatprep.subr.mxu0 0.0
        %2403 = vmatpush2.msra.mxu0 0.0
        %2404 = vmatprep.subr.mxu0 0.0
        %2405 = vmatpush2.msra.mxu0 0.0
        %2406 = vmatprep.subr.mxu0 0.0
        %2407 = vmatpush2.msra.mxu0 0.0
        %2408 = vmatprep.mubr.f32.mxu0 0.0
        %2409 = vmatmul.mubr.f32.gmra.mxu0 %v2319
        %v2410 = vpop.f32.mrf.mxu0
        %v2411 = vadd.f32 %v2342, %v2410
        %v2412 = vpop.f32.mrf.mxu0
        %2413 = vmatprep.mubr.f32.mxu0 0.0
        %2414 = vmatmul.mubr.f32.gmra.mxu0 %v2320
        %v2415 = vpop.f32.mrf.mxu0
        %v2416 = vadd.f32 %v2342, %v2415
        %v2417 = vpop.f32.mrf.mxu0
        %2418 = vdwg.mxu0
        %v2419 = vadd.f32 %v2225, %v2411
        %v2420 = vadd.f32 %v2226, %v2416
        %2421 = vst.msk [vmem:[#allocation2] sm:$0xff] %vm938, %v2419
        %2422 = vst.msk [vmem:[#allocation2 + $0x8] sm:$0xff] %vm938, %v2420
        %p2423 = scmp.eq.s32.totalorder %s43, 1
        // Predicated region
        $region109: #{tpu_custom_call.1} parent=91 // pred_check
          %p2424 = pneg %p2423
        $region110: #{tpu_custom_call.1} parent=91 // pred_check_branch
          %2426 = sbr.rel (%p2424) target = $region112
        $region111: #{tpu_custom_call.1} parent=91 // pred_region
          %2427 = vst.msk [vmem:[%s865] sm:$0xff] %vm938, %v2419
          %2428 = vst.msk [vmem:[%s865 + $0x8] sm:$0xff] %vm938, %v2420
        $region112: #{tpu_custom_call.1} parent=91 // pred_fallthru
          _
        %s2429 = sand.u32 %s526, 1
        %s2430 = scalar_lea.sflag [#allocation5], %s2429
        %s2431 = sand.u32 %s526, 1
        %s2432 = smul.addr %s2431, 16
        %s2433 = scalar_lea.vmem [#allocation9], %s2432
        // Predicated region
        $region113: #{tpu_custom_call.1} parent=91 // pred_check
          %p2434 = pneg %p536
        $region114: #{tpu_custom_call.1} parent=91 // pred_check_branch
          %2436 = sbr.rel (%p2434) target = $region116
        $region115: #{tpu_custom_call.1} parent=91 // pred_region
          %s2438 = ssub.s32 256, 256
          %2439 = vsyncadd %s2430, %s2438
          %s2440 = smul.addr %s42, 2
          %s2441 = smul.addr %s2440, 128
          %s2442 = scalar_lea.hbm %s18, %s2441
          %s2443 = sshll.u32 %s2433, 4
          %s2444 = int_to_ptr.vmem [resolvable:$true] %s2443
          %2449 = dma.vmem_to_hbm [thread:$0]  %s2444, 256, %s2442, %s2430, 128, 128, 8
        $region116: #{tpu_custom_call.1} parent=91 // pred_fallthru
          _
      $region92: #{tpu_custom_call.1} parent=5 // pred_fallthru
        _
      %p2450 = scmp.le.s32.totalorder 2, %s33
      // Predicated region
      $region117: #{tpu_custom_call.1} parent=5 // pred_check
        %p2451 = pneg %p2450
      $region118: #{tpu_custom_call.1} parent=5 // pred_check_branch
        %2453 = sbr.rel (%p2451) target = $region120
      $region119: #{tpu_custom_call.1} parent=5 // pred_region
        %s2454 = ssub.s32 %s33, 2
        // Predicated region
        $region121: #{tpu_custom_call.1} parent=119 // pred_check
          %p2455 = pneg %p542
        $region122: #{tpu_custom_call.1} parent=119 // pred_check_branch
          %2457 = sbr.rel (%p2455) target = $region124
        $region123: #{tpu_custom_call.1} parent=119 // pred_region
          %s2458 = sand.u32 %s527, 1
          %s2459 = scalar_lea.sflag [#allocation5], %s2458
          %s2460 = sand.u32 %s527, 1
          %s2461 = smul.addr %s2460, 16
          %s2462 = scalar_lea.vmem [#allocation9], %s2461
          %2463 = dma.done %s2459, 256
        $region124: #{tpu_custom_call.1} parent=119 // pred_fallthru
          _
      $region120: #{tpu_custom_call.1} parent=5 // pred_fallthru
        _
    $region6: #{tpu_custom_call.1} parent=1 // loop_footer
      %s37 = sadd.s32 1, %s33
    $region7: #{tpu_custom_call.1} parent=1 // loop_footer_branch
      %32 = sbr.rel target = $region3
    $region8: #{tpu_custom_call.1} parent=1 // loop_exit
      _
    %2464 = vsyncpa [#allocation4], 1
    %s2465 = scalar_lea.sflag [#allocation4], 1
    %2466 = vsyncpa %s2465, 1
    %2467 = vsyncpa [#allocation7], 1
    %s2468 = scalar_lea.sflag [#allocation7], 1
    %2469 = vsyncpa %s2468, 1
    %2470 = vsyncpa [#allocation5], 1
    %s2471 = scalar_lea.sflag [#allocation5], 1
    %2472 = vsyncpa %s2471, 1

</llo_original>
